<compile_context>
chip_gen: v7x
topology: tpu7x:2x2x1
jax: 0.10.0
libtpu: 0.0.40
codegen_flags: <defaults>
</compile_context>

<pallas_src>
import numpy as np
import jax
import jax.numpy as jnp
from jax.experimental import pallas as pl
from jax.experimental.pallas import tpu as pltpu

LATENT = 32
K, S = 7, 3
L0, L1, L2 = 205, 67, 21          # lengths: 205 -(conv s3)-> 67 -(conv s3)-> 21 (decoder mirrors)
C1, C2 = 16, 32                   # channels after conv1 / conv2
FC = C2 * L2                      # 672
LANE_PAD = 256                    # lane-aligned output width (205 -> 256)
UP1 = S * (L2 - 1) + 1            # 61  = width of 3x zero-stuffed upsample of a length-21 row
UP2 = S * (L1 - 1) + 1            # 199 = same for a length-67 row


def _shift_cols(block, left, right):
    """Pad `block` with `left` zero columns on the left and `right` on the right."""
    parts = []
    if left > 0:
        parts.append(jnp.zeros((block.shape[0], left), block.dtype))
    parts.append(block)
    if right > 0:
        parts.append(jnp.zeros((block.shape[0], right), block.dtype))
    return jnp.concatenate(parts, axis=1) if len(parts) > 1 else block


# ----------------------------------------------------------------------------
# Pallas kernel: conv1 -> conv2 -> enc fc -> dec fc -> convT1 -> convT2
# ----------------------------------------------------------------------------
def ae_kernel(x_ref, w1e_ref, b1e_ref, d1_ref, w2e_ref, b2e_ref, d2_ref,
              wfe_ref, bfe_ref, wfd_ref, bfd_ref,
              w1d_ref, b1d_ref, u1_ref, w2d_ref, b2d_ref, u2_ref, out_ref):
    f32 = jnp.float32
    x = x_ref[...]                                                   # [1, 256]

    # -- encoder conv1: Conv1d(1, 16, 7, stride=3); dropout(eval)=id; ReLU --
    xsh = jnp.concatenate([x[:, k:k + UP2] for k in range(K)], axis=0)           # [7, 199]
    xd = jnp.dot(xsh, d1_ref[...], preferred_element_type=f32)                   # [7, 67]  xd[k,lo] = x[3lo+k]
    a1 = jnp.dot(w1e_ref[...], xd, preferred_element_type=f32) + b1e_ref[...]    # [16, 67]
    a1 = jnp.maximum(a1, 0.0)

    # -- encoder conv2: Conv1d(16, 32, 7, stride=3); ReLU --
    a1d = jnp.dot(a1, d2_ref[...], preferred_element_type=f32)                   # [16, 147] cols (k, lo)
    p2 = jnp.concatenate([a1d[:, k * L2:(k + 1) * L2] for k in range(K)], axis=0)  # [112, 21] rows (k, ci)
    a2 = jnp.dot(w2e_ref[...], p2, preferred_element_type=f32) + b2e_ref[...]    # [32, 21]
    a2 = jnp.maximum(a2, 0.0)

    # -- encoder fc1: channel-major flatten (ci*21 + li) then project to latent --
    flat = jnp.concatenate([a2[c:c + 1, :] for c in range(C2)], axis=1)          # [1, 672]
    z = jnp.dot(flat, wfe_ref[...], preferred_element_type=f32) + bfe_ref[...]   # [1, 32]

    # -- decoder fc1 + ReLU, then view(-1, 32, 21) --
    h = jnp.dot(z, wfd_ref[...], preferred_element_type=f32) + bfd_ref[...]      # [1, 672]
    h = jnp.maximum(h, 0.0)
    hm = jnp.concatenate([h[:, c * L2:(c + 1) * L2] for c in range(C2)], axis=0)  # [32, 21]

    # -- decoder convT1: ConvTranspose1d(32, 16, 7, stride=3); ReLU --
    c_cat = jnp.dot(w1d_ref[...], hm, preferred_element_type=f32)                # [112, 21] rows (k, co)
    d_cat = jnp.dot(c_cat, u1_ref[...], preferred_element_type=f32)              # [112, 61] 3x upsampled
    y1 = None
    for k in range(K):                                   # overlap-add: tap k -> shift by k lanes
        blk = _shift_cols(d_cat[k * C1:(k + 1) * C1, :], k, (K - 1) - k)          # [16, 67]
        y1 = blk if y1 is None else y1 + blk
    y1 = jnp.maximum(y1 + b1d_ref[...], 0.0)                                     # [16, 67]

    # -- decoder convT2: ConvTranspose1d(16, 1, 7, stride=3) --
    t = jnp.dot(w2d_ref[...], y1, preferred_element_type=f32)                    # [7, 67]
    tu = jnp.dot(t, u2_ref[...], preferred_element_type=f32)                     # [7, 199]
    y2 = None
    for k in range(K):
        row = _shift_cols(tu[k:k + 1, :], k, (K - 1) - k)                        # [1, 205]
        y2 = row if y2 is None else y2 + row
    y2 = y2 + b2d_ref[...]                                                       # [1, 205]

    # lane-dense padded store (205 -> 256 lanes, 1 -> 8 sublanes); wrapper slices it back
    y2p = _shift_cols(y2, 0, LANE_PAD - L0)                                      # [1, 256]
    out_ref[...] = jnp.broadcast_to(y2p, out_ref.shape)


# ----------------------------------------------------------------------------
# Host-side glue: compact per-tap weight re-layouts + tiny 0/1 stride matrices
# ----------------------------------------------------------------------------
def build_operands(w1e, b1e, w2e, b2e, wfe, bfe, wfd, bfd, w1d, b1d, w2d, b2d):
    arrs = [np.asarray(a, np.float32)
            for a in (w1e, b1e, w2e, b2e, wfe, bfe, wfd, bfd, w1d, b1d, w2d, b2d)]
    w1e, b1e, w2e, b2e, wfe, bfe, wfd, bfd, w1d, b1d, w2d, b2d = arrs

    d1 = np.zeros((UP2, L1), np.float32)                 # stride-3 downsample (conv1 gather)
    d1[np.arange(L1) * S, np.arange(L1)] = 1.0
    d2 = np.zeros((L1, K * L2), np.float32)              # per-tap stride-3 gather (conv2 im2col)
    for k in range(K):
        d2[np.arange(L2) * S + k, k * L2 + np.arange(L2)] = 1.0
    u1 = np.zeros((L2, UP1), np.float32)                 # 3x zero-stuffing upsample (convT1)
    u1[np.arange(L2), np.arange(L2) * S] = 1.0
    u2 = np.zeros((L1, UP2), np.float32)                 # 3x zero-stuffing upsample (convT2)
    u2[np.arange(L1), np.arange(L1) * S] = 1.0

    ops = (
        w1e[:, 0, :],                                    # [16, 7]
        b1e.reshape(C1, 1),
        d1,                                              # [199, 67]
        w2e.transpose(0, 2, 1).reshape(C2, K * C1),      # [32, 112]  cols (k, ci)
        b2e.reshape(C2, 1),
        d2,                                              # [67, 147]
        wfe,                                             # [672, 32]
        bfe.reshape(1, LATENT),
        wfd,                                             # [32, 672]
        bfd.reshape(1, FC),
        w1d.transpose(2, 1, 0).reshape(K * C1, C2),      # [112, 32]  rows (k, co)
        b1d.reshape(C1, 1),
        u1,                                              # [21, 61]
        w2d[:, 0, :].T,                                  # [7, 16]
        b2d.reshape(1, 1),
        u2,                                              # [67, 199]
    )
    return tuple(jnp.asarray(o) for o in ops)


def autoencoder_forward(x, ops):
    """x: any 205-element input (the module's x.view(1, 1, 205) pins batch to 1)."""
    xp = jnp.zeros((1, LANE_PAD), jnp.float32)
    xp = xp.at[:, :L0].set(jnp.reshape(x, (1, L0)).astype(jnp.float32))
    out = pl.pallas_call(
        ae_kernel,
        out_shape=jax.ShapeDtypeStruct((8, LANE_PAD), jnp.float32),
        in_specs=[pl.BlockSpec(memory_space=pltpu.MemorySpace.VMEM)] * (1 + len(ops)),
        out_specs=pl.BlockSpec(memory_space=pltpu.MemorySpace.VMEM),
    )(xp, *ops)
    return out[:1, :L0]


# ----------------------------------------------------------------------------
# Pure numpy reference (direct Conv1d / ConvTranspose1d semantics)
# ----------------------------------------------------------------------------
def ref_conv1d(x, w, b, stride):
    Bn, Ci, Li = x.shape
    Co, _, Kk = w.shape
    Lo = (Li - Kk) // stride + 1
    y = np.zeros((Bn, Co, Lo), np.float32)
    for lo in range(Lo):
        patch = x[:, :, lo * stride: lo * stride + Kk]
        y[:, :, lo] = np.einsum('bck,ock->bo', patch, w)
    return y + b[None, :, None]


def ref_convt1d(x, w, b, stride):
    Bn, Ci, Li = x.shape
    _, Co, Kk = w.shape
    Lo = (Li - 1) * stride + Kk
    y = np.zeros((Bn, Co, Lo), np.float32)
    for li in range(Li):
        y[:, :, li * stride: li * stride + Kk] += np.einsum('bc,cok->bok', x[:, :, li], w)
    return y + b[None, :, None]


def ref_forward(x, w1e, b1e, w2e, b2e, wfe, bfe, wfd, bfd, w1d, b1d, w2d, b2d):
    a1 = np.maximum(ref_conv1d(x.reshape(1, 1, L0), w1e, b1e, S), 0.0)   # dropout = identity (eval)
    a2 = np.maximum(ref_conv1d(a1, w2e, b2e, S), 0.0)
    z = a2.reshape(1, FC) @ wfe + bfe
    h = np.maximum(z @ wfd + bfd, 0.0)
    y1 = np.maximum(ref_convt1d(h.reshape(1, C2, L2), w1d, b1d, S), 0.0)
    y2 = ref_convt1d(y1, w2d, b2d, S)
    return y2.reshape(1, L0)


if __name__ == "__main__":
    key = jax.random.PRNGKey(0)
    ks = jax.random.split(key, 13)

    def uni(k, shape, bound):
        return jax.random.uniform(k, shape, jnp.float32, -bound, bound)

    x = jax.random.normal(ks[0], (1, L0), dtype=jnp.float32)

    w1e = uni(ks[1], (C1, 1, K), 1.0 / np.sqrt(1 * K))
    b1e = uni(ks[2], (C1,), 1.0 / np.sqrt(1 * K))
    w2e = uni(ks[3], (C2, C1, K), 1.0 / np.sqrt(C1 * K))
    b2e = uni(ks[4], (C2,), 1.0 / np.sqrt(C1 * K))
    wfe = uni(ks[5], (FC, LATENT), 1.0 / np.sqrt(FC))
    bfe = uni(ks[6], (LATENT,), 1.0 / np.sqrt(FC))
    wfd = uni(ks[7], (LATENT, FC), 1.0 / np.sqrt(LATENT))
    bfd = uni(ks[8], (FC,), 1.0 / np.sqrt(LATENT))
    w1d = uni(ks[9], (C2, C1, K), 1.0 / np.sqrt(C2 * K))
    b1d = uni(ks[10], (C1,), 1.0 / np.sqrt(C2 * K))
    w2d = uni(ks[11], (C1, 1, K), 1.0 / np.sqrt(C1 * K))
    b2d = uni(ks[12], (1,), 1.0 / np.sqrt(C1 * K))

    ops = build_operands(w1e, b1e, w2e, b2e, wfe, bfe, wfd, bfd, w1d, b1d, w2d, b2d)

    out = autoencoder_forward(x, ops)
    out = jax.block_until_ready(out)

    ref = ref_forward(np.asarray(x),
                      np.asarray(w1e), np.asarray(b1e),
                      np.asarray(w2e), np.asarray(b2e),
                      np.asarray(wfe), np.asarray(bfe),
                      np.asarray(wfd), np.asarray(bfd),
                      np.asarray(w1d), np.asarray(b1d),
                      np.asarray(w2d), np.asarray(b2d))

    assert out.shape == (1, L0), out.shape
    # Default (single-pass bf16) MXU precision -> tolerance relaxed vs. full f32.
    np.testing.assert_allclose(np.asarray(out), ref, rtol=5e-2, atol=5e-3)
    print("KERNEL_OK")
</pallas_src>

<mosaic_0001>
module attributes {stable_mosaic.version = 11 : i64} {
  func.func @ae_kernel(%arg0: memref<1x256xf32, #tpu.memory_space<vmem>>, %arg1: memref<16x7xf32, #tpu.memory_space<vmem>>, %arg2: memref<16x1xf32, #tpu.memory_space<vmem>>, %arg3: memref<199x67xf32, #tpu.memory_space<vmem>>, %arg4: memref<32x112xf32, #tpu.memory_space<vmem>>, %arg5: memref<32x1xf32, #tpu.memory_space<vmem>>, %arg6: memref<67x147xf32, #tpu.memory_space<vmem>>, %arg7: memref<672x32xf32, #tpu.memory_space<vmem>>, %arg8: memref<1x32xf32, #tpu.memory_space<vmem>>, %arg9: memref<32x672xf32, #tpu.memory_space<vmem>>, %arg10: memref<1x672xf32, #tpu.memory_space<vmem>>, %arg11: memref<112x32xf32, #tpu.memory_space<vmem>>, %arg12: memref<16x1xf32, #tpu.memory_space<vmem>>, %arg13: memref<21x61xf32, #tpu.memory_space<vmem>>, %arg14: memref<7x16xf32, #tpu.memory_space<vmem>>, %arg15: memref<1x1xf32, #tpu.memory_space<vmem>>, %arg16: memref<67x199xf32, #tpu.memory_space<vmem>>, %arg17: memref<8x256xf32, #tpu.memory_space<vmem>>) attributes {dimension_semantics = [], scalar_prefetch = 0 : i64, scratch_operands = 0 : i64, tpu.core_type = #tpu.core_type<tc>} {
    %c0 = arith.constant 0 : index
    %c0_0 = arith.constant 0 : index
    %0 = vector.load %arg0[%c0, %c0_0] : memref<1x256xf32, #tpu.memory_space<vmem>>, vector<1x256xf32>
    %1 = vector.extract_strided_slice %0 {offsets = [0, 0], sizes = [1, 199], strides = [1, 1]} : vector<1x256xf32> to vector<1x199xf32>
    %2 = vector.extract_strided_slice %0 {offsets = [0, 1], sizes = [1, 199], strides = [1, 1]} : vector<1x256xf32> to vector<1x199xf32>
    %3 = vector.extract_strided_slice %0 {offsets = [0, 2], sizes = [1, 199], strides = [1, 1]} : vector<1x256xf32> to vector<1x199xf32>
    %4 = vector.extract_strided_slice %0 {offsets = [0, 3], sizes = [1, 199], strides = [1, 1]} : vector<1x256xf32> to vector<1x199xf32>
    %5 = vector.extract_strided_slice %0 {offsets = [0, 4], sizes = [1, 199], strides = [1, 1]} : vector<1x256xf32> to vector<1x199xf32>
    %6 = vector.extract_strided_slice %0 {offsets = [0, 5], sizes = [1, 199], strides = [1, 1]} : vector<1x256xf32> to vector<1x199xf32>
    %7 = vector.extract_strided_slice %0 {offsets = [0, 6], sizes = [1, 199], strides = [1, 1]} : vector<1x256xf32> to vector<1x199xf32>
    %8 = tpu.concatenate %1, %2, %3, %4, %5, %6, %7 in 0 : vector<1x199xf32>, vector<1x199xf32>, vector<1x199xf32>, vector<1x199xf32>, vector<1x199xf32>, vector<1x199xf32>, vector<1x199xf32> -> vector<7x199xf32>
    %c0_1 = arith.constant 0 : index
    %c0_2 = arith.constant 0 : index
    %9 = vector.load %arg3[%c0_1, %c0_2] : memref<199x67xf32, #tpu.memory_space<vmem>>, vector<199x67xf32>
    %cst = arith.constant dense<0.000000e+00> : vector<7x67xf32>
    %10 = tpu.matmul %8, %9, %cst {dimension_numbers = #tpu.dot_dimension_numbers<[1], [0], [0], [1], [0, 0, 1, 1], [], []>} : vector<7x199xf32>, vector<199x67xf32>, vector<7x67xf32> -> vector<7x67xf32>
    %c0_3 = arith.constant 0 : index
    %c0_4 = arith.constant 0 : index
    %11 = vector.load %arg1[%c0_3, %c0_4] : memref<16x7xf32, #tpu.memory_space<vmem>>, vector<16x7xf32>
    %cst_5 = arith.constant dense<0.000000e+00> : vector<16x67xf32>
    %12 = tpu.matmul %11, %10, %cst_5 {dimension_numbers = #tpu.dot_dimension_numbers<[1], [0], [0], [1], [0, 0, 1, 1], [], []>} : vector<16x7xf32>, vector<7x67xf32>, vector<16x67xf32> -> vector<16x67xf32>
    %c0_6 = arith.constant 0 : index
    %c0_7 = arith.constant 0 : index
    %13 = vector.load %arg2[%c0_6, %c0_7] : memref<16x1xf32, #tpu.memory_space<vmem>>, vector<16x1xf32>
    %14 = vector.broadcast %13 : vector<16x1xf32> to vector<16x67xf32>
    %15 = arith.addf %12, %14 : vector<16x67xf32>
    %cst_8 = arith.constant 0.000000e+00 : f32
    %16 = vector.broadcast %cst_8 : f32 to vector<16x67xf32>
    %17 = arith.maximumf %15, %16 : vector<16x67xf32>
    %c0_9 = arith.constant 0 : index
    %c0_10 = arith.constant 0 : index
    %18 = vector.load %arg6[%c0_9, %c0_10] : memref<67x147xf32, #tpu.memory_space<vmem>>, vector<67x147xf32>
    %cst_11 = arith.constant dense<0.000000e+00> : vector<16x147xf32>
    %19 = tpu.matmul %17, %18, %cst_11 {dimension_numbers = #tpu.dot_dimension_numbers<[1], [0], [0], [1], [0, 0, 1, 1], [], []>} : vector<16x67xf32>, vector<67x147xf32>, vector<16x147xf32> -> vector<16x147xf32>
    %20 = vector.extract_strided_slice %19 {offsets = [0, 0], sizes = [16, 21], strides = [1, 1]} : vector<16x147xf32> to vector<16x21xf32>
    %21 = vector.extract_strided_slice %19 {offsets = [0, 21], sizes = [16, 21], strides = [1, 1]} : vector<16x147xf32> to vector<16x21xf32>
    %22 = vector.extract_strided_slice %19 {offsets = [0, 42], sizes = [16, 21], strides = [1, 1]} : vector<16x147xf32> to vector<16x21xf32>
    %23 = vector.extract_strided_slice %19 {offsets = [0, 63], sizes = [16, 21], strides = [1, 1]} : vector<16x147xf32> to vector<16x21xf32>
    %24 = vector.extract_strided_slice %19 {offsets = [0, 84], sizes = [16, 21], strides = [1, 1]} : vector<16x147xf32> to vector<16x21xf32>
    %25 = vector.extract_strided_slice %19 {offsets = [0, 105], sizes = [16, 21], strides = [1, 1]} : vector<16x147xf32> to vector<16x21xf32>
    %26 = vector.extract_strided_slice %19 {offsets = [0, 126], sizes = [16, 21], strides = [1, 1]} : vector<16x147xf32> to vector<16x21xf32>
    %27 = tpu.concatenate %20, %21, %22, %23, %24, %25, %26 in 0 : vector<16x21xf32>, vector<16x21xf32>, vector<16x21xf32>, vector<16x21xf32>, vector<16x21xf32>, vector<16x21xf32>, vector<16x21xf32> -> vector<112x21xf32>
    %c0_12 = arith.constant 0 : index
    %c0_13 = arith.constant 0 : index
    %28 = vector.load %arg4[%c0_12, %c0_13] : memref<32x112xf32, #tpu.memory_space<vmem>>, vector<32x112xf32>
    %cst_14 = arith.constant dense<0.000000e+00> : vector<32x21xf32>
    %29 = tpu.matmul %28, %27, %cst_14 {dimension_numbers = #tpu.dot_dimension_numbers<[1], [0], [0], [1], [0, 0, 1, 1], [], []>} : vector<32x112xf32>, vector<112x21xf32>, vector<32x21xf32> -> vector<32x21xf32>
    %c0_15 = arith.constant 0 : index
    %c0_16 = arith.constant 0 : index
    %30 = vector.load %arg5[%c0_15, %c0_16] : memref<32x1xf32, #tpu.memory_space<vmem>>, vector<32x1xf32>
    %31 = vector.broadcast %30 : vector<32x1xf32> to vector<32x21xf32>
    %32 = arith.addf %29, %31 : vector<32x21xf32>
    %cst_17 = arith.constant 0.000000e+00 : f32
    %33 = vector.broadcast %cst_17 : f32 to vector<32x21xf32>
    %34 = arith.maximumf %32, %33 : vector<32x21xf32>
    %35 = vector.extract_strided_slice %34 {offsets = [0, 0], sizes = [1, 21], strides = [1, 1]} : vector<32x21xf32> to vector<1x21xf32>
    %36 = vector.extract_strided_slice %34 {offsets = [1, 0], sizes = [1, 21], strides = [1, 1]} : vector<32x21xf32> to vector<1x21xf32>
    %37 = vector.extract_strided_slice %34 {offsets = [2, 0], sizes = [1, 21], strides = [1, 1]} : vector<32x21xf32> to vector<1x21xf32>
    %38 = vector.extract_strided_slice %34 {offsets = [3, 0], sizes = [1, 21], strides = [1, 1]} : vector<32x21xf32> to vector<1x21xf32>
    %39 = vector.extract_strided_slice %34 {offsets = [4, 0], sizes = [1, 21], strides = [1, 1]} : vector<32x21xf32> to vector<1x21xf32>
    %40 = vector.extract_strided_slice %34 {offsets = [5, 0], sizes = [1, 21], strides = [1, 1]} : vector<32x21xf32> to vector<1x21xf32>
    %41 = vector.extract_strided_slice %34 {offsets = [6, 0], sizes = [1, 21], strides = [1, 1]} : vector<32x21xf32> to vector<1x21xf32>
    %42 = vector.extract_strided_slice %34 {offsets = [7, 0], sizes = [1, 21], strides = [1, 1]} : vector<32x21xf32> to vector<1x21xf32>
    %43 = vector.extract_strided_slice %34 {offsets = [8, 0], sizes = [1, 21], strides = [1, 1]} : vector<32x21xf32> to vector<1x21xf32>
    %44 = vector.extract_strided_slice %34 {offsets = [9, 0], sizes = [1, 21], strides = [1, 1]} : vector<32x21xf32> to vector<1x21xf32>
    %45 = vector.extract_strided_slice %34 {offsets = [10, 0], sizes = [1, 21], strides = [1, 1]} : vector<32x21xf32> to vector<1x21xf32>
    %46 = vector.extract_strided_slice %34 {offsets = [11, 0], sizes = [1, 21], strides = [1, 1]} : vector<32x21xf32> to vector<1x21xf32>
    %47 = vector.extract_strided_slice %34 {offsets = [12, 0], sizes = [1, 21], strides = [1, 1]} : vector<32x21xf32> to vector<1x21xf32>
    %48 = vector.extract_strided_slice %34 {offsets = [13, 0], sizes = [1, 21], strides = [1, 1]} : vector<32x21xf32> to vector<1x21xf32>
    %49 = vector.extract_strided_slice %34 {offsets = [14, 0], sizes = [1, 21], strides = [1, 1]} : vector<32x21xf32> to vector<1x21xf32>
    %50 = vector.extract_strided_slice %34 {offsets = [15, 0], sizes = [1, 21], strides = [1, 1]} : vector<32x21xf32> to vector<1x21xf32>
    %51 = vector.extract_strided_slice %34 {offsets = [16, 0], sizes = [1, 21], strides = [1, 1]} : vector<32x21xf32> to vector<1x21xf32>
    %52 = vector.extract_strided_slice %34 {offsets = [17, 0], sizes = [1, 21], strides = [1, 1]} : vector<32x21xf32> to vector<1x21xf32>
    %53 = vector.extract_strided_slice %34 {offsets = [18, 0], sizes = [1, 21], strides = [1, 1]} : vector<32x21xf32> to vector<1x21xf32>
    %54 = vector.extract_strided_slice %34 {offsets = [19, 0], sizes = [1, 21], strides = [1, 1]} : vector<32x21xf32> to vector<1x21xf32>
    %55 = vector.extract_strided_slice %34 {offsets = [20, 0], sizes = [1, 21], strides = [1, 1]} : vector<32x21xf32> to vector<1x21xf32>
    %56 = vector.extract_strided_slice %34 {offsets = [21, 0], sizes = [1, 21], strides = [1, 1]} : vector<32x21xf32> to vector<1x21xf32>
    %57 = vector.extract_strided_slice %34 {offsets = [22, 0], sizes = [1, 21], strides = [1, 1]} : vector<32x21xf32> to vector<1x21xf32>
    %58 = vector.extract_strided_slice %34 {offsets = [23, 0], sizes = [1, 21], strides = [1, 1]} : vector<32x21xf32> to vector<1x21xf32>
    %59 = vector.extract_strided_slice %34 {offsets = [24, 0], sizes = [1, 21], strides = [1, 1]} : vector<32x21xf32> to vector<1x21xf32>
    %60 = vector.extract_strided_slice %34 {offsets = [25, 0], sizes = [1, 21], strides = [1, 1]} : vector<32x21xf32> to vector<1x21xf32>
    %61 = vector.extract_strided_slice %34 {offsets = [26, 0], sizes = [1, 21], strides = [1, 1]} : vector<32x21xf32> to vector<1x21xf32>
    %62 = vector.extract_strided_slice %34 {offsets = [27, 0], sizes = [1, 21], strides = [1, 1]} : vector<32x21xf32> to vector<1x21xf32>
    %63 = vector.extract_strided_slice %34 {offsets = [28, 0], sizes = [1, 21], strides = [1, 1]} : vector<32x21xf32> to vector<1x21xf32>
    %64 = vector.extract_strided_slice %34 {offsets = [29, 0], sizes = [1, 21], strides = [1, 1]} : vector<32x21xf32> to vector<1x21xf32>
    %65 = vector.extract_strided_slice %34 {offsets = [30, 0], sizes = [1, 21], strides = [1, 1]} : vector<32x21xf32> to vector<1x21xf32>
    %66 = vector.extract_strided_slice %34 {offsets = [31, 0], sizes = [1, 21], strides = [1, 1]} : vector<32x21xf32> to vector<1x21xf32>
    %67 = tpu.concatenate %35, %36, %37, %38, %39, %40, %41, %42, %43, %44, %45, %46, %47, %48, %49, %50 in 1 : vector<1x21xf32>, vector<1x21xf32>, vector<1x21xf32>, vector<1x21xf32>, vector<1x21xf32>, vector<1x21xf32>, vector<1x21xf32>, vector<1x21xf32>, vector<1x21xf32>, vector<1x21xf32>, vector<1x21xf32>, vector<1x21xf32>, vector<1x21xf32>, vector<1x21xf32>, vector<1x21xf32>, vector<1x21xf32> -> vector<1x336xf32>
    %68 = tpu.concatenate %51, %52, %53, %54, %55, %56, %57, %58, %59, %60, %61, %62, %63, %64, %65, %66 in 1 : vector<1x21xf32>, vector<1x21xf32>, vector<1x21xf32>, vector<1x21xf32>, vector<1x21xf32>, vector<1x21xf32>, vector<1x21xf32>, vector<1x21xf32>, vector<1x21xf32>, vector<1x21xf32>, vector<1x21xf32>, vector<1x21xf32>, vector<1x21xf32>, vector<1x21xf32>, vector<1x21xf32>, vector<1x21xf32> -> vector<1x336xf32>
    %69 = tpu.concatenate %67, %68 in 1 : vector<1x336xf32>, vector<1x336xf32> -> vector<1x672xf32>
    %c0_18 = arith.constant 0 : index
    %c0_19 = arith.constant 0 : index
    %70 = vector.load %arg7[%c0_18, %c0_19] : memref<672x32xf32, #tpu.memory_space<vmem>>, vector<672x32xf32>
    %cst_20 = arith.constant dense<0.000000e+00> : vector<1x32xf32>
    %71 = tpu.matmul %69, %70, %cst_20 {dimension_numbers = #tpu.dot_dimension_numbers<[1], [0], [0], [1], [0, 0, 1, 1], [], []>} : vector<1x672xf32>, vector<672x32xf32>, vector<1x32xf32> -> vector<1x32xf32>
    %c0_21 = arith.constant 0 : index
    %c0_22 = arith.constant 0 : index
    %72 = vector.load %arg8[%c0_21, %c0_22] : memref<1x32xf32, #tpu.memory_space<vmem>>, vector<1x32xf32>
    %73 = arith.addf %71, %72 : vector<1x32xf32>
    %c0_23 = arith.constant 0 : index
    %c0_24 = arith.constant 0 : index
    %74 = vector.load %arg9[%c0_23, %c0_24] : memref<32x672xf32, #tpu.memory_space<vmem>>, vector<32x672xf32>
    %cst_25 = arith.constant dense<0.000000e+00> : vector<1x672xf32>
    %75 = tpu.matmul %73, %74, %cst_25 {dimension_numbers = #tpu.dot_dimension_numbers<[1], [0], [0], [1], [0, 0, 1, 1], [], []>} : vector<1x32xf32>, vector<32x672xf32>, vector<1x672xf32> -> vector<1x672xf32>
    %c0_26 = arith.constant 0 : index
    %c0_27 = arith.constant 0 : index
    %76 = vector.load %arg10[%c0_26, %c0_27] : memref<1x672xf32, #tpu.memory_space<vmem>>, vector<1x672xf32>
    %77 = arith.addf %75, %76 : vector<1x672xf32>
    %cst_28 = arith.constant 0.000000e+00 : f32
    %78 = vector.broadcast %cst_28 : f32 to vector<1x672xf32>
    %79 = arith.maximumf %77, %78 : vector<1x672xf32>
    %80 = vector.extract_strided_slice %79 {offsets = [0, 0], sizes = [1, 21], strides = [1, 1]} : vector<1x672xf32> to vector<1x21xf32>
    %81 = vector.extract_strided_slice %79 {offsets = [0, 21], sizes = [1, 21], strides = [1, 1]} : vector<1x672xf32> to vector<1x21xf32>
    %82 = vector.extract_strided_slice %79 {offsets = [0, 42], sizes = [1, 21], strides = [1, 1]} : vector<1x672xf32> to vector<1x21xf32>
    %83 = vector.extract_strided_slice %79 {offsets = [0, 63], sizes = [1, 21], strides = [1, 1]} : vector<1x672xf32> to vector<1x21xf32>
    %84 = vector.extract_strided_slice %79 {offsets = [0, 84], sizes = [1, 21], strides = [1, 1]} : vector<1x672xf32> to vector<1x21xf32>
    %85 = vector.extract_strided_slice %79 {offsets = [0, 105], sizes = [1, 21], strides = [1, 1]} : vector<1x672xf32> to vector<1x21xf32>
    %86 = vector.extract_strided_slice %79 {offsets = [0, 126], sizes = [1, 21], strides = [1, 1]} : vector<1x672xf32> to vector<1x21xf32>
    %87 = vector.extract_strided_slice %79 {offsets = [0, 147], sizes = [1, 21], strides = [1, 1]} : vector<1x672xf32> to vector<1x21xf32>
    %88 = vector.extract_strided_slice %79 {offsets = [0, 168], sizes = [1, 21], strides = [1, 1]} : vector<1x672xf32> to vector<1x21xf32>
    %89 = vector.extract_strided_slice %79 {offsets = [0, 189], sizes = [1, 21], strides = [1, 1]} : vector<1x672xf32> to vector<1x21xf32>
    %90 = vector.extract_strided_slice %79 {offsets = [0, 210], sizes = [1, 21], strides = [1, 1]} : vector<1x672xf32> to vector<1x21xf32>
    %91 = vector.extract_strided_slice %79 {offsets = [0, 231], sizes = [1, 21], strides = [1, 1]} : vector<1x672xf32> to vector<1x21xf32>
    %92 = vector.extract_strided_slice %79 {offsets = [0, 252], sizes = [1, 21], strides = [1, 1]} : vector<1x672xf32> to vector<1x21xf32>
    %93 = vector.extract_strided_slice %79 {offsets = [0, 273], sizes = [1, 21], strides = [1, 1]} : vector<1x672xf32> to vector<1x21xf32>
    %94 = vector.extract_strided_slice %79 {offsets = [0, 294], sizes = [1, 21], strides = [1, 1]} : vector<1x672xf32> to vector<1x21xf32>
    %95 = vector.extract_strided_slice %79 {offsets = [0, 315], sizes = [1, 21], strides = [1, 1]} : vector<1x672xf32> to vector<1x21xf32>
    %96 = vector.extract_strided_slice %79 {offsets = [0, 336], sizes = [1, 21], strides = [1, 1]} : vector<1x672xf32> to vector<1x21xf32>
    %97 = vector.extract_strided_slice %79 {offsets = [0, 357], sizes = [1, 21], strides = [1, 1]} : vector<1x672xf32> to vector<1x21xf32>
    %98 = vector.extract_strided_slice %79 {offsets = [0, 378], sizes = [1, 21], strides = [1, 1]} : vector<1x672xf32> to vector<1x21xf32>
    %99 = vector.extract_strided_slice %79 {offsets = [0, 399], sizes = [1, 21], strides = [1, 1]} : vector<1x672xf32> to vector<1x21xf32>
    %100 = vector.extract_strided_slice %79 {offsets = [0, 420], sizes = [1, 21], strides = [1, 1]} : vector<1x672xf32> to vector<1x21xf32>
    %101 = vector.extract_strided_slice %79 {offsets = [0, 441], sizes = [1, 21], strides = [1, 1]} : vector<1x672xf32> to vector<1x21xf32>
    %102 = vector.extract_strided_slice %79 {offsets = [0, 462], sizes = [1, 21], strides = [1, 1]} : vector<1x672xf32> to vector<1x21xf32>
    %103 = vector.extract_strided_slice %79 {offsets = [0, 483], sizes = [1, 21], strides = [1, 1]} : vector<1x672xf32> to vector<1x21xf32>
    %104 = vector.extract_strided_slice %79 {offsets = [0, 504], sizes = [1, 21], strides = [1, 1]} : vector<1x672xf32> to vector<1x21xf32>
    %105 = vector.extract_strided_slice %79 {offsets = [0, 525], sizes = [1, 21], strides = [1, 1]} : vector<1x672xf32> to vector<1x21xf32>
    %106 = vector.extract_strided_slice %79 {offsets = [0, 546], sizes = [1, 21], strides = [1, 1]} : vector<1x672xf32> to vector<1x21xf32>
    %107 = vector.extract_strided_slice %79 {offsets = [0, 567], sizes = [1, 21], strides = [1, 1]} : vector<1x672xf32> to vector<1x21xf32>
    %108 = vector.extract_strided_slice %79 {offsets = [0, 588], sizes = [1, 21], strides = [1, 1]} : vector<1x672xf32> to vector<1x21xf32>
    %109 = vector.extract_strided_slice %79 {offsets = [0, 609], sizes = [1, 21], strides = [1, 1]} : vector<1x672xf32> to vector<1x21xf32>
    %110 = vector.extract_strided_slice %79 {offsets = [0, 630], sizes = [1, 21], strides = [1, 1]} : vector<1x672xf32> to vector<1x21xf32>
    %111 = vector.extract_strided_slice %79 {offsets = [0, 651], sizes = [1, 21], strides = [1, 1]} : vector<1x672xf32> to vector<1x21xf32>
    %112 = tpu.concatenate %80, %81, %82, %83, %84, %85, %86, %87, %88, %89, %90, %91, %92, %93, %94, %95 in 0 : vector<1x21xf32>, vector<1x21xf32>, vector<1x21xf32>, vector<1x21xf32>, vector<1x21xf32>, vector<1x21xf32>, vector<1x21xf32>, vector<1x21xf32>, vector<1x21xf32>, vector<1x21xf32>, vector<1x21xf32>, vector<1x21xf32>, vector<1x21xf32>, vector<1x21xf32>, vector<1x21xf32>, vector<1x21xf32> -> vector<16x21xf32>
    %113 = tpu.concatenate %96, %97, %98, %99, %100, %101, %102, %103, %104, %105, %106, %107, %108, %109, %110, %111 in 0 : vector<1x21xf32>, vector<1x21xf32>, vector<1x21xf32>, vector<1x21xf32>, vector<1x21xf32>, vector<1x21xf32>, vector<1x21xf32>, vector<1x21xf32>, vector<1x21xf32>, vector<1x21xf32>, vector<1x21xf32>, vector<1x21xf32>, vector<1x21xf32>, vector<1x21xf32>, vector<1x21xf32>, vector<1x21xf32> -> vector<16x21xf32>
    %114 = tpu.concatenate %112, %113 in 0 : vector<16x21xf32>, vector<16x21xf32> -> vector<32x21xf32>
    %c0_29 = arith.constant 0 : index
    %c0_30 = arith.constant 0 : index
    %115 = vector.load %arg11[%c0_29, %c0_30] : memref<112x32xf32, #tpu.memory_space<vmem>>, vector<112x32xf32>
    %cst_31 = arith.constant dense<0.000000e+00> : vector<112x21xf32>
    %116 = tpu.matmul %115, %114, %cst_31 {dimension_numbers = #tpu.dot_dimension_numbers<[1], [0], [0], [1], [0, 0, 1, 1], [], []>} : vector<112x32xf32>, vector<32x21xf32>, vector<112x21xf32> -> vector<112x21xf32>
    %c0_32 = arith.constant 0 : index
    %c0_33 = arith.constant 0 : index
    %117 = vector.load %arg13[%c0_32, %c0_33] : memref<21x61xf32, #tpu.memory_space<vmem>>, vector<21x61xf32>
    %cst_34 = arith.constant dense<0.000000e+00> : vector<112x61xf32>
    %118 = tpu.matmul %116, %117, %cst_34 {dimension_numbers = #tpu.dot_dimension_numbers<[1], [0], [0], [1], [0, 0, 1, 1], [], []>} : vector<112x21xf32>, vector<21x61xf32>, vector<112x61xf32> -> vector<112x61xf32>
    %119 = vector.extract_strided_slice %118 {offsets = [0, 0], sizes = [16, 61], strides = [1, 1]} : vector<112x61xf32> to vector<16x61xf32>
    %cst_35 = arith.constant 0.000000e+00 : f32
    %120 = vector.broadcast %cst_35 : f32 to vector<16x6xf32>
    %121 = tpu.concatenate %119, %120 in 1 : vector<16x61xf32>, vector<16x6xf32> -> vector<16x67xf32>
    %122 = vector.extract_strided_slice %118 {offsets = [16, 0], sizes = [16, 61], strides = [1, 1]} : vector<112x61xf32> to vector<16x61xf32>
    %cst_36 = arith.constant 0.000000e+00 : f32
    %123 = vector.broadcast %cst_36 : f32 to vector<16x1xf32>
    %cst_37 = arith.constant 0.000000e+00 : f32
    %124 = vector.broadcast %cst_37 : f32 to vector<16x5xf32>
    %125 = tpu.concatenate %123, %122, %124 in 1 : vector<16x1xf32>, vector<16x61xf32>, vector<16x5xf32> -> vector<16x67xf32>
    %126 = arith.addf %121, %125 : vector<16x67xf32>
    %127 = vector.extract_strided_slice %118 {offsets = [32, 0], sizes = [16, 61], strides = [1, 1]} : vector<112x61xf32> to vector<16x61xf32>
    %cst_38 = arith.constant 0.000000e+00 : f32
    %128 = vector.broadcast %cst_38 : f32 to vector<16x2xf32>
    %cst_39 = arith.constant 0.000000e+00 : f32
    %129 = vector.broadcast %cst_39 : f32 to vector<16x4xf32>
    %130 = tpu.concatenate %128, %127, %129 in 1 : vector<16x2xf32>, vector<16x61xf32>, vector<16x4xf32> -> vector<16x67xf32>
    %131 = arith.addf %126, %130 : vector<16x67xf32>
    %132 = vector.extract_strided_slice %118 {offsets = [48, 0], sizes = [16, 61], strides = [1, 1]} : vector<112x61xf32> to vector<16x61xf32>
    %cst_40 = arith.constant 0.000000e+00 : f32
    %133 = vector.broadcast %cst_40 : f32 to vector<16x3xf32>
    %cst_41 = arith.constant 0.000000e+00 : f32
    %134 = vector.broadcast %cst_41 : f32 to vector<16x3xf32>
    %135 = tpu.concatenate %133, %132, %134 in 1 : vector<16x3xf32>, vector<16x61xf32>, vector<16x3xf32> -> vector<16x67xf32>
    %136 = arith.addf %131, %135 : vector<16x67xf32>
    %137 = vector.extract_strided_slice %118 {offsets = [64, 0], sizes = [16, 61], strides = [1, 1]} : vector<112x61xf32> to vector<16x61xf32>
    %cst_42 = arith.constant 0.000000e+00 : f32
    %138 = vector.broadcast %cst_42 : f32 to vector<16x4xf32>
    %cst_43 = arith.constant 0.000000e+00 : f32
    %139 = vector.broadcast %cst_43 : f32 to vector<16x2xf32>
    %140 = tpu.concatenate %138, %137, %139 in 1 : vector<16x4xf32>, vector<16x61xf32>, vector<16x2xf32> -> vector<16x67xf32>
    %141 = arith.addf %136, %140 : vector<16x67xf32>
    %142 = vector.extract_strided_slice %118 {offsets = [80, 0], sizes = [16, 61], strides = [1, 1]} : vector<112x61xf32> to vector<16x61xf32>
    %cst_44 = arith.constant 0.000000e+00 : f32
    %143 = vector.broadcast %cst_44 : f32 to vector<16x5xf32>
    %cst_45 = arith.constant 0.000000e+00 : f32
    %144 = vector.broadcast %cst_45 : f32 to vector<16x1xf32>
    %145 = tpu.concatenate %143, %142, %144 in 1 : vector<16x5xf32>, vector<16x61xf32>, vector<16x1xf32> -> vector<16x67xf32>
    %146 = arith.addf %141, %145 : vector<16x67xf32>
    %147 = vector.extract_strided_slice %118 {offsets = [96, 0], sizes = [16, 61], strides = [1, 1]} : vector<112x61xf32> to vector<16x61xf32>
    %cst_46 = arith.constant 0.000000e+00 : f32
    %148 = vector.broadcast %cst_46 : f32 to vector<16x6xf32>
    %149 = tpu.concatenate %148, %147 in 1 : vector<16x6xf32>, vector<16x61xf32> -> vector<16x67xf32>
    %150 = arith.addf %146, %149 : vector<16x67xf32>
    %c0_47 = arith.constant 0 : index
    %c0_48 = arith.constant 0 : index
    %151 = vector.load %arg12[%c0_47, %c0_48] : memref<16x1xf32, #tpu.memory_space<vmem>>, vector<16x1xf32>
    %152 = vector.broadcast %151 : vector<16x1xf32> to vector<16x67xf32>
    %153 = arith.addf %150, %152 : vector<16x67xf32>
    %cst_49 = arith.constant 0.000000e+00 : f32
    %154 = vector.broadcast %cst_49 : f32 to vector<16x67xf32>
    %155 = arith.maximumf %153, %154 : vector<16x67xf32>
    %c0_50 = arith.constant 0 : index
    %c0_51 = arith.constant 0 : index
    %156 = vector.load %arg14[%c0_50, %c0_51] : memref<7x16xf32, #tpu.memory_space<vmem>>, vector<7x16xf32>
    %cst_52 = arith.constant dense<0.000000e+00> : vector<7x67xf32>
    %157 = tpu.matmul %156, %155, %cst_52 {dimension_numbers = #tpu.dot_dimension_numbers<[1], [0], [0], [1], [0, 0, 1, 1], [], []>} : vector<7x16xf32>, vector<16x67xf32>, vector<7x67xf32> -> vector<7x67xf32>
    %c0_53 = arith.constant 0 : index
    %c0_54 = arith.constant 0 : index
    %158 = vector.load %arg16[%c0_53, %c0_54] : memref<67x199xf32, #tpu.memory_space<vmem>>, vector<67x199xf32>
    %cst_55 = arith.constant dense<0.000000e+00> : vector<7x199xf32>
    %159 = tpu.matmul %157, %158, %cst_55 {dimension_numbers = #tpu.dot_dimension_numbers<[1], [0], [0], [1], [0, 0, 1, 1], [], []>} : vector<7x67xf32>, vector<67x199xf32>, vector<7x199xf32> -> vector<7x199xf32>
    %160 = vector.extract_strided_slice %159 {offsets = [0, 0], sizes = [1, 199], strides = [1, 1]} : vector<7x199xf32> to vector<1x199xf32>
    %cst_56 = arith.constant 0.000000e+00 : f32
    %161 = vector.broadcast %cst_56 : f32 to vector<1x6xf32>
    %162 = tpu.concatenate %160, %161 in 1 : vector<1x199xf32>, vector<1x6xf32> -> vector<1x205xf32>
    %163 = vector.extract_strided_slice %159 {offsets = [1, 0], sizes = [1, 199], strides = [1, 1]} : vector<7x199xf32> to vector<1x199xf32>
    %cst_57 = arith.constant 0.000000e+00 : f32
    %164 = vector.broadcast %cst_57 : f32 to vector<1x1xf32>
    %cst_58 = arith.constant 0.000000e+00 : f32
    %165 = vector.broadcast %cst_58 : f32 to vector<1x5xf32>
    %166 = tpu.concatenate %164, %163, %165 in 1 : vector<1x1xf32>, vector<1x199xf32>, vector<1x5xf32> -> vector<1x205xf32>
    %167 = arith.addf %162, %166 : vector<1x205xf32>
    %168 = vector.extract_strided_slice %159 {offsets = [2, 0], sizes = [1, 199], strides = [1, 1]} : vector<7x199xf32> to vector<1x199xf32>
    %cst_59 = arith.constant 0.000000e+00 : f32
    %169 = vector.broadcast %cst_59 : f32 to vector<1x2xf32>
    %cst_60 = arith.constant 0.000000e+00 : f32
    %170 = vector.broadcast %cst_60 : f32 to vector<1x4xf32>
    %171 = tpu.concatenate %169, %168, %170 in 1 : vector<1x2xf32>, vector<1x199xf32>, vector<1x4xf32> -> vector<1x205xf32>
    %172 = arith.addf %167, %171 : vector<1x205xf32>
    %173 = vector.extract_strided_slice %159 {offsets = [3, 0], sizes = [1, 199], strides = [1, 1]} : vector<7x199xf32> to vector<1x199xf32>
    %cst_61 = arith.constant 0.000000e+00 : f32
    %174 = vector.broadcast %cst_61 : f32 to vector<1x3xf32>
    %cst_62 = arith.constant 0.000000e+00 : f32
    %175 = vector.broadcast %cst_62 : f32 to vector<1x3xf32>
    %176 = tpu.concatenate %174, %173, %175 in 1 : vector<1x3xf32>, vector<1x199xf32>, vector<1x3xf32> -> vector<1x205xf32>
    %177 = arith.addf %172, %176 : vector<1x205xf32>
    %178 = vector.extract_strided_slice %159 {offsets = [4, 0], sizes = [1, 199], strides = [1, 1]} : vector<7x199xf32> to vector<1x199xf32>
    %cst_63 = arith.constant 0.000000e+00 : f32
    %179 = vector.broadcast %cst_63 : f32 to vector<1x4xf32>
    %cst_64 = arith.constant 0.000000e+00 : f32
    %180 = vector.broadcast %cst_64 : f32 to vector<1x2xf32>
    %181 = tpu.concatenate %179, %178, %180 in 1 : vector<1x4xf32>, vector<1x199xf32>, vector<1x2xf32> -> vector<1x205xf32>
    %182 = arith.addf %177, %181 : vector<1x205xf32>
    %183 = vector.extract_strided_slice %159 {offsets = [5, 0], sizes = [1, 199], strides = [1, 1]} : vector<7x199xf32> to vector<1x199xf32>
    %cst_65 = arith.constant 0.000000e+00 : f32
    %184 = vector.broadcast %cst_65 : f32 to vector<1x5xf32>
    %cst_66 = arith.constant 0.000000e+00 : f32
    %185 = vector.broadcast %cst_66 : f32 to vector<1x1xf32>
    %186 = tpu.concatenate %184, %183, %185 in 1 : vector<1x5xf32>, vector<1x199xf32>, vector<1x1xf32> -> vector<1x205xf32>
    %187 = arith.addf %182, %186 : vector<1x205xf32>
    %188 = vector.extract_strided_slice %159 {offsets = [6, 0], sizes = [1, 199], strides = [1, 1]} : vector<7x199xf32> to vector<1x199xf32>
    %cst_67 = arith.constant 0.000000e+00 : f32
    %189 = vector.broadcast %cst_67 : f32 to vector<1x6xf32>
    %190 = tpu.concatenate %189, %188 in 1 : vector<1x6xf32>, vector<1x199xf32> -> vector<1x205xf32>
    %191 = arith.addf %187, %190 : vector<1x205xf32>
    %c0_68 = arith.constant 0 : index
    %c0_69 = arith.constant 0 : index
    %192 = vector.load %arg15[%c0_68, %c0_69] : memref<1x1xf32, #tpu.memory_space<vmem>>, vector<1x1xf32>
    %193 = vector.broadcast %192 : vector<1x1xf32> to vector<1x205xf32>
    %194 = arith.addf %191, %193 : vector<1x205xf32>
    %cst_70 = arith.constant 0.000000e+00 : f32
    %195 = vector.broadcast %cst_70 : f32 to vector<1x51xf32>
    %196 = tpu.concatenate %194, %195 in 1 : vector<1x205xf32>, vector<1x51xf32> -> vector<1x256xf32>
    %197 = vector.shape_cast %196 : vector<1x256xf32> to vector<1x256xf32>
    %198 = vector.broadcast %197 : vector<1x256xf32> to vector<8x256xf32>
    %c0_71 = arith.constant 0 : index
    %c0_72 = arith.constant 0 : index
    %199 = vector.load %arg17[%c0_71, %c0_72] : memref<8x256xf32, #tpu.memory_space<vmem>>, vector<8x256xf32>
    tpu.vector_store %arg17[%c0_71, %c0_72], %198 {strides = array<i32>} : memref<8x256xf32, #tpu.memory_space<vmem>>, vector<8x256xf32>,
    return
  }
}

</mosaic_0001>

<llo_original>
// kernel: tpu_custom_call.1
$region0: #{tpu_custom_call.1}
  #allocation0 [shape = 'u32[]', space=smem, size = 0x4, offset = 0x4, fixed_abs, tag = 'smem constant byte address 0x4 - core index']
  #allocation1 [shape = 'u32[144,128]{1,0:T(1,128)}', space=vmem, size = 0x12000, scoped, tag = 'internal scratch']
  #allocation2 [shape = 'f32[1,1]{1,0:T(1,128)S(1)}', space=vmem, size = 0x200, scoped, tag = 'scoped memory for tpu_custom_call.1']
  %s0 = inlined_call_operand.vmem [shape: f32[1,256], index: 0, kind: input, shape index: {}]
  %s1 = inlined_call_operand.vmem [shape: f32[16,7], index: 1, kind: input, shape index: {}]
  %s2 = inlined_call_operand.vmem [shape: f32[16,1], index: 2, kind: input, shape index: {}]
  %s3 = inlined_call_operand.vmem [shape: f32[199,67], index: 3, kind: input, shape index: {}]
  %s4 = inlined_call_operand.vmem [shape: f32[32,112], index: 4, kind: input, shape index: {}]
  %s5 = inlined_call_operand.vmem [shape: f32[32,1], index: 5, kind: input, shape index: {}]
  %s6 = inlined_call_operand.vmem [shape: f32[67,147], index: 6, kind: input, shape index: {}]
  %s7 = inlined_call_operand.vmem [shape: f32[672,32], index: 7, kind: input, shape index: {}]
  %s8 = inlined_call_operand.vmem [shape: f32[1,32], index: 8, kind: input, shape index: {}]
  %s9 = inlined_call_operand.vmem [shape: f32[32,672], index: 9, kind: input, shape index: {}]
  %s10 = inlined_call_operand.vmem [shape: f32[1,672], index: 10, kind: input, shape index: {}]
  %s11 = inlined_call_operand.vmem [shape: f32[112,32], index: 11, kind: input, shape index: {}]
  %s12 = inlined_call_operand.vmem [shape: f32[16,1], index: 12, kind: input, shape index: {}]
  %s13 = inlined_call_operand.vmem [shape: f32[21,61], index: 13, kind: input, shape index: {}]
  %s14 = inlined_call_operand.vmem [shape: f32[7,16], index: 14, kind: input, shape index: {}]
  %s15 = inlined_call_operand.<no memory space> [shape: f32[1,1], index: 15, kind: input, shape index: {}]
  %s16 = inlined_call_operand.vmem [shape: f32[67,199], index: 16, kind: input, shape index: {}]
  %s17 = inlined_call_operand.hbm [shape: f32[8,256], index: 17, kind: output, shape index: {}]
  %s18 = sld [smem:[#allocation0]]
  $region78: #{tpu_custom_call.1} parent=0
    _
  %s20 = ssub.s32 1, %s18
  %s21 = scalar_select 0, %s20, %s18
  %v22 = vstv %s15
  %23 = vst [vmem:[#allocation2] sm:$0x1] %v22
  $region1: #{tpu_custom_call.1} parent=0
    #allocation3 [shape = 'u8[8192]{0}', space=vmem, size = 0x2000, scoped, tag = 'output window, operand 0, single buffered']
    #allocation4 [shape = 's32[1]{0}', space=sflag, size = 0x4, scoped, tag = 'scoped memory for tpu_custom_call.1']
    %24 = vsyncpa [#allocation4], 0
    // Predicated region
    $region2: #{tpu_custom_call.1} parent=1 // pred_check
      _
    $region3: #{tpu_custom_call.1} parent=1 // pred_check_branch
      %26 = sbr.rel (0) target = $region5
    $region4: #{tpu_custom_call.1} parent=1 // pred_region
      _
    $region5: #{tpu_custom_call.1} parent=1 // pred_fallthru
      _
    // Predicated region
    $region6: #{tpu_custom_call.1} parent=1 // pred_check
      _
    $region7: #{tpu_custom_call.1} parent=1 // pred_check_branch
      %28 = sbr.rel (0) target = $region9
    $region8: #{tpu_custom_call.1} parent=1 // pred_region
      _
    $region9: #{tpu_custom_call.1} parent=1 // pred_fallthru
      _
    // Predicated region
    $region10: #{tpu_custom_call.1} parent=1 // pred_check
      _
    $region11: #{tpu_custom_call.1} parent=1 // pred_check_branch
      %30 = sbr.rel (0) target = $region13
    $region12: #{tpu_custom_call.1} parent=1 // pred_region
      _
    $region13: #{tpu_custom_call.1} parent=1 // pred_fallthru
      _
    // Predicated region
    $region14: #{tpu_custom_call.1} parent=1 // pred_check
      _
    $region15: #{tpu_custom_call.1} parent=1 // pred_check_branch
      %32 = sbr.rel (0) target = $region17
    $region16: #{tpu_custom_call.1} parent=1 // pred_region
      _
    $region17: #{tpu_custom_call.1} parent=1 // pred_fallthru
      _
    // Predicated region
    $region18: #{tpu_custom_call.1} parent=1 // pred_check
      _
    $region19: #{tpu_custom_call.1} parent=1 // pred_check_branch
      %34 = sbr.rel (0) target = $region21
    $region20: #{tpu_custom_call.1} parent=1 // pred_region
      _
    $region21: #{tpu_custom_call.1} parent=1 // pred_fallthru
      _
    // Predicated region
    $region22: #{tpu_custom_call.1} parent=1 // pred_check
      _
    $region23: #{tpu_custom_call.1} parent=1 // pred_check_branch
      %36 = sbr.rel (0) target = $region25
    $region24: #{tpu_custom_call.1} parent=1 // pred_region
      _
    $region25: #{tpu_custom_call.1} parent=1 // pred_fallthru
      _
    // Predicated region
    $region26: #{tpu_custom_call.1} parent=1 // pred_check
      _
    $region27: #{tpu_custom_call.1} parent=1 // pred_check_branch
      %38 = sbr.rel (0) target = $region29
    $region28: #{tpu_custom_call.1} parent=1 // pred_region
      _
    $region29: #{tpu_custom_call.1} parent=1 // pred_fallthru
      _
    // Predicated region
    $region30: #{tpu_custom_call.1} parent=1 // pred_check
      _
    $region31: #{tpu_custom_call.1} parent=1 // pred_check_branch
      %40 = sbr.rel (0) target = $region33
    $region32: #{tpu_custom_call.1} parent=1 // pred_region
      _
    $region33: #{tpu_custom_call.1} parent=1 // pred_fallthru
      _
    // Predicated region
    $region34: #{tpu_custom_call.1} parent=1 // pred_check
      _
    $region35: #{tpu_custom_call.1} parent=1 // pred_check_branch
      %42 = sbr.rel (0) target = $region37
    $region36: #{tpu_custom_call.1} parent=1 // pred_region
      _
    $region37: #{tpu_custom_call.1} parent=1 // pred_fallthru
      _
    // Predicated region
    $region38: #{tpu_custom_call.1} parent=1 // pred_check
      _
    $region39: #{tpu_custom_call.1} parent=1 // pred_check_branch
      %44 = sbr.rel (0) target = $region41
    $region40: #{tpu_custom_call.1} parent=1 // pred_region
      _
    $region41: #{tpu_custom_call.1} parent=1 // pred_fallthru
      _
    // Predicated region
    $region42: #{tpu_custom_call.1} parent=1 // pred_check
      _
    $region43: #{tpu_custom_call.1} parent=1 // pred_check_branch
      %46 = sbr.rel (0) target = $region45
    $region44: #{tpu_custom_call.1} parent=1 // pred_region
      _
    $region45: #{tpu_custom_call.1} parent=1 // pred_fallthru
      _
    // Predicated region
    $region46: #{tpu_custom_call.1} parent=1 // pred_check
      _
    $region47: #{tpu_custom_call.1} parent=1 // pred_check_branch
      %48 = sbr.rel (0) target = $region49
    $region48: #{tpu_custom_call.1} parent=1 // pred_region
      _
    $region49: #{tpu_custom_call.1} parent=1 // pred_fallthru
      _
    // Predicated region
    $region50: #{tpu_custom_call.1} parent=1 // pred_check
      _
    $region51: #{tpu_custom_call.1} parent=1 // pred_check_branch
      %50 = sbr.rel (0) target = $region53
    $region52: #{tpu_custom_call.1} parent=1 // pred_region
      _
    $region53: #{tpu_custom_call.1} parent=1 // pred_fallthru
      _
    // Predicated region
    $region54: #{tpu_custom_call.1} parent=1 // pred_check
      _
    $region55: #{tpu_custom_call.1} parent=1 // pred_check_branch
      %52 = sbr.rel (0) target = $region57
    $region56: #{tpu_custom_call.1} parent=1 // pred_region
      _
    $region57: #{tpu_custom_call.1} parent=1 // pred_fallthru
      _
    // Predicated region
    $region58: #{tpu_custom_call.1} parent=1 // pred_check
      _
    $region59: #{tpu_custom_call.1} parent=1 // pred_check_branch
      %54 = sbr.rel (0) target = $region61
    $region60: #{tpu_custom_call.1} parent=1 // pred_region
      _
    $region61: #{tpu_custom_call.1} parent=1 // pred_fallthru
      _
    // Predicated region
    $region62: #{tpu_custom_call.1} parent=1 // pred_check
      _
    $region63: #{tpu_custom_call.1} parent=1 // pred_check_branch
      %56 = sbr.rel (0) target = $region65
    $region64: #{tpu_custom_call.1} parent=1 // pred_region
      _
    $region65: #{tpu_custom_call.1} parent=1 // pred_fallthru
      _
    // Predicated region
    $region66: #{tpu_custom_call.1} parent=1 // pred_check
      _
    $region67: #{tpu_custom_call.1} parent=1 // pred_check_branch
      %58 = sbr.rel (0) target = $region69
    $region68: #{tpu_custom_call.1} parent=1 // pred_region
      _
    $region69: #{tpu_custom_call.1} parent=1 // pred_fallthru
      _
    %v59 = vld [vmem:[%s0] sm:$0x3]
    %v61 = vlaneseq
    %v62 = vshrl.u32 %v61, 7
    %v63 = vsub.s32 0, %v62
    %v64 = vrot.slane %v59, %v63
    %v65 = vlaneseq
    %v66 = vshrl.u32 %v65, 7
    %v67 = vsub.s32 1, %v66
    %v68 = vrot.slane %v59, %v67
    %71 = vrot.lane.b32.xlu0 %v64, 127
    %v72 = vpop.permute.xlu0 %71
    %73 = vrot.lane.b32.xlu0 %v68, 127
    %v74 = vpop.permute.xlu0 %73
    %vm75 = vcmask 1039360
    %v76 = vsel %vm75, %v72, %v74
    %79 = vrot.lane.b32.xlu0 %v64, 126
    %v80 = vpop.permute.xlu0 %79
    %81 = vrot.lane.b32.xlu0 %v68, 126
    %v82 = vpop.permute.xlu0 %81
    %vm83 = vcmask 1031168
    %v84 = vsel %vm83, %v80, %v82
    %87 = vrot.lane.b32.xlu0 %v64, 125
    %v88 = vpop.permute.xlu0 %87
    %89 = vrot.lane.b32.xlu0 %v68, 125
    %v90 = vpop.permute.xlu0 %89
    %vm91 = vcmask 1022976
    %v92 = vsel %vm91, %v88, %v90
    %95 = vrot.lane.b32.xlu0 %v64, 124
    %v96 = vpop.permute.xlu0 %95
    %97 = vrot.lane.b32.xlu0 %v68, 124
    %v98 = vpop.permute.xlu0 %97
    %vm99 = vcmask 1014784
    %v100 = vsel %vm99, %v96, %v98
    %103 = vrot.lane.b32.xlu0 %v64, 123
    %v104 = vpop.permute.xlu0 %103
    %105 = vrot.lane.b32.xlu0 %v68, 123
    %v106 = vpop.permute.xlu0 %105
    %vm107 = vcmask 1006592
    %v108 = vsel %vm107, %v104, %v106
    %111 = vrot.lane.b32.xlu0 %v64, 122
    %v112 = vpop.permute.xlu0 %111
    %113 = vrot.lane.b32.xlu0 %v68, 122
    %v114 = vpop.permute.xlu0 %113
    %vm115 = vcmask 998400
    %v116 = vsel %vm115, %v112, %v114
    %vm119 = vcmask 1040384
    %v120 = vsel %vm119, %v64, %v76
    %v121 = vsel %vm119, %v68, %v74
    %vm122 = vcmask 1041408
    %v123 = vsel %vm122, %v120, %v84
    %v124 = vsel %vm122, %v121, %v82
    %vm125 = vcmask 1042432
    %v126 = vsel %vm125, %v123, %v92
    %v127 = vsel %vm125, %v124, %v90
    %vm128 = vcmask 1043456
    %v129 = vsel %vm128, %v126, %v100
    %v130 = vsel %vm128, %v127, %v98
    %vm131 = vcmask 1044480
    %v132 = vsel %vm131, %v129, %v108
    %v133 = vsel %vm131, %v130, %v106
    %vm134 = vcmask 1045504
    %v135 = vsel %vm134, %v132, %v116
    %v136 = vsel %vm134, %v133, %v114
    %v137 = vld [vmem:[%s3] sm:$0xff]
    %v138 = vld [vmem:[%s3 + $0x8] sm:$0xff]
    %v139 = vld [vmem:[%s3 + $0x10] sm:$0xff]
    %v140 = vld [vmem:[%s3 + $0x18] sm:$0xff]
    %v141 = vld [vmem:[%s3 + $0x20] sm:$0xff]
    %v142 = vld [vmem:[%s3 + $0x28] sm:$0xff]
    %v143 = vld [vmem:[%s3 + $0x30] sm:$0xff]
    %v144 = vld [vmem:[%s3 + $0x38] sm:$0xff]
    %v145 = vld [vmem:[%s3 + $0x40] sm:$0xff]
    %v146 = vld [vmem:[%s3 + $0x48] sm:$0xff]
    %v147 = vld [vmem:[%s3 + $0x50] sm:$0xff]
    %v148 = vld [vmem:[%s3 + $0x58] sm:$0xff]
    %v149 = vld [vmem:[%s3 + $0x60] sm:$0xff]
    %v150 = vld [vmem:[%s3 + $0x68] sm:$0xff]
    %v151 = vld [vmem:[%s3 + $0x70] sm:$0xff]
    %v152 = vld [vmem:[%s3 + $0x78] sm:$0xff]
    %v153 = vld [vmem:[%s3 + $0x80] sm:$0xff]
    %v154 = vld [vmem:[%s3 + $0x88] sm:$0xff]
    %v155 = vld [vmem:[%s3 + $0x90] sm:$0xff]
    %v156 = vld [vmem:[%s3 + $0x98] sm:$0xff]
    %v157 = vld [vmem:[%s3 + $0xa0] sm:$0xff]
    %v158 = vld [vmem:[%s3 + $0xa8] sm:$0xff]
    %v159 = vld [vmem:[%s3 + $0xb0] sm:$0xff]
    %v160 = vld [vmem:[%s3 + $0xb8] sm:$0xff]
    %v161 = vld [vmem:[%s3 + $0xc0] sm:$0x7f]
    %vm162 = vcmask 580608
    %v164 = vsel %vm162, %v136, 0
    %vm166 = vcmask 1046528
    %v168 = vsel %vm166, %v161, 0
    %170 = vmatprep.subr.mxu0 0.0
    %171 = vmatpush1.msra.mxu0 %v137
    %172 = vmatprep.subr.mxu0 0.0
    %173 = vmatpush1.msra.mxu0 %v138
    %174 = vmatprep.subr.mxu0 0.0
    %175 = vmatpush1.msra.mxu0 %v139
    %176 = vmatprep.subr.mxu0 0.0
    %177 = vmatpush1.msra.mxu0 %v140
    %178 = vmatprep.subr.mxu0 0.0
    %179 = vmatpush1.msra.mxu0 %v141
    %180 = vmatprep.subr.mxu0 0.0
    %181 = vmatpush1.msra.mxu0 %v142
    %182 = vmatprep.subr.mxu0 0.0
    %183 = vmatpush1.msra.mxu0 %v143
    %184 = vmatprep.subr.mxu0 0.0
    %185 = vmatpush1.msra.mxu0 %v144
    %186 = vmatprep.subr.mxu0 0.0
    %187 = vmatpush1.msra.mxu0 %v145
    %188 = vmatprep.subr.mxu0 0.0
    %189 = vmatpush1.msra.mxu0 %v146
    %190 = vmatprep.subr.mxu0 0.0
    %191 = vmatpush1.msra.mxu0 %v147
    %192 = vmatprep.subr.mxu0 0.0
    %193 = vmatpush1.msra.mxu0 %v148
    %194 = vmatprep.subr.mxu0 0.0
    %195 = vmatpush1.msra.mxu0 %v149
    %196 = vmatprep.subr.mxu0 0.0
    %197 = vmatpush1.msra.mxu0 %v150
    %198 = vmatprep.subr.mxu0 0.0
    %199 = vmatpush1.msra.mxu0 %v151
    %200 = vmatprep.subr.mxu0 0.0
    %201 = vmatpush1.msra.mxu0 %v152
    %202 = vmatprep.subr.mxu0 0.0
    %203 = vmatpush1.msra.mxu0 %v153
    %204 = vmatprep.subr.mxu0 0.0
    %205 = vmatpush1.msra.mxu0 %v154
    %206 = vmatprep.subr.mxu0 0.0
    %207 = vmatpush1.msra.mxu0 %v155
    %208 = vmatprep.subr.mxu0 0.0
    %209 = vmatpush1.msra.mxu0 %v156
    %210 = vmatprep.subr.mxu0 0.0
    %211 = vmatpush1.msra.mxu0 %v157
    %212 = vmatprep.subr.mxu0 0.0
    %213 = vmatpush1.msra.mxu0 %v158
    %214 = vmatprep.subr.mxu0 0.0
    %215 = vmatpush1.msra.mxu0 %v159
    %216 = vmatprep.subr.mxu0 0.0
    %217 = vmatpush1.msra.mxu0 %v160
    %218 = vmatprep.subr.mxu0 0.0
    %219 = vmatpush1.msra.mxu0 %v168
    %220 = vmatprep.subr.mxu0 0.0
    %221 = vmatpush1.msra.mxu0 0.0
    %222 = vmatprep.subr.mxu0 0.0
    %223 = vmatpush1.msra.mxu0 0.0
    %224 = vmatprep.subr.mxu0 0.0
    %225 = vmatpush1.msra.mxu0 0.0
    %226 = vmatprep.subr.mxu0 0.0
    %227 = vmatpush1.msra.mxu0 0.0
    %228 = vmatprep.subr.mxu0 0.0
    %229 = vmatpush1.msra.mxu0 0.0
    %230 = vmatprep.subr.mxu0 0.0
    %231 = vmatpush1.msra.mxu0 0.0
    %232 = vmatprep.subr.mxu0 0.0
    %233 = vmatpush1.msra.mxu0 0.0
    %234 = vmatprep.mubr.f32.mxu0 %v164
    %235 = vmatmul.mubr.f32.gmra.mrb[0].mxu0 %v135
    %v236 = vpop.f32.mrb[0].mxu0
    %v237 = vadd.f32 0.0, %v236
    %v238 = vpop.f32.mrb[0].mxu0
    %239 = vdwg.mxu0
    %v240 = vld [vmem:[%s1] sm:$0xff]
    %v241 = vld [vmem:[%s1 + $0x8] sm:$0xff]
    %v242 = vld [vmem:[%s2] sm:$0xff]
    %v243 = vld [vmem:[%s2 + $0x8] sm:$0xff]
    %245 = vset.pattern.permute.xlu0 0
    %246 = vperm.xlu0 %245, %v242
    %v247 = vpop.permute.xlu0 %246
    %250 = vset.pattern.permute.xlu0 0
    %251 = vperm.xlu0 %250, %v243
    %v252 = vpop.permute.xlu0 %251
    %vm254 = vcmask 56320
    %v256 = vsel %vm254, %v240, 0
    %v259 = vsel %vm254, %v241, 0
    %v262 = vsel %vm166, %v237, 0
    %264 = vmatprep.subr.mxu0 0.0
    %265 = vmatpush1.msra.mxu0 %v262
    %266 = vmatprep.subr.mxu0 0.0
    %267 = vmatpush1.msra.mxu0 0.0
    %268 = vmatprep.subr.mxu0 0.0
    %269 = vmatpush1.msra.mxu0 0.0
    %270 = vmatprep.subr.mxu0 0.0
    %271 = vmatpush1.msra.mxu0 0.0
    %272 = vmatprep.subr.mxu0 0.0
    %273 = vmatpush1.msra.mxu0 0.0
    %274 = vmatprep.subr.mxu0 0.0
    %275 = vmatpush1.msra.mxu0 0.0
    %276 = vmatprep.subr.mxu0 0.0
    %277 = vmatpush1.msra.mxu0 0.0
    %278 = vmatprep.subr.mxu0 0.0
    %279 = vmatpush1.msra.mxu0 0.0
    %280 = vmatprep.subr.mxu0 0.0
    %281 = vmatpush1.msra.mxu0 0.0
    %282 = vmatprep.subr.mxu0 0.0
    %283 = vmatpush1.msra.mxu0 0.0
    %284 = vmatprep.subr.mxu0 0.0
    %285 = vmatpush1.msra.mxu0 0.0
    %286 = vmatprep.subr.mxu0 0.0
    %287 = vmatpush1.msra.mxu0 0.0
    %288 = vmatprep.subr.mxu0 0.0
    %289 = vmatpush1.msra.mxu0 0.0
    %290 = vmatprep.subr.mxu0 0.0
    %291 = vmatpush1.msra.mxu0 0.0
    %292 = vmatprep.subr.mxu0 0.0
    %293 = vmatpush1.msra.mxu0 0.0
    %294 = vmatprep.subr.mxu0 0.0
    %295 = vmatpush1.msra.mxu0 0.0
    %296 = vmatprep.subr.mxu0 0.0
    %297 = vmatpush1.msra.mxu0 0.0
    %298 = vmatprep.subr.mxu0 0.0
    %299 = vmatpush1.msra.mxu0 0.0
    %300 = vmatprep.subr.mxu0 0.0
    %301 = vmatpush1.msra.mxu0 0.0
    %302 = vmatprep.subr.mxu0 0.0
    %303 = vmatpush1.msra.mxu0 0.0
    %304 = vmatprep.subr.mxu0 0.0
    %305 = vmatpush1.msra.mxu0 0.0
    %306 = vmatprep.subr.mxu0 0.0
    %307 = vmatpush1.msra.mxu0 0.0
    %308 = vmatprep.subr.mxu0 0.0
    %309 = vmatpush1.msra.mxu0 0.0
    %310 = vmatprep.subr.mxu0 0.0
    %311 = vmatpush1.msra.mxu0 0.0
    %312 = vmatprep.subr.mxu0 0.0
    %313 = vmatpush1.msra.mxu0 0.0
    %314 = vmatprep.subr.mxu0 0.0
    %315 = vmatpush1.msra.mxu0 0.0
    %316 = vmatprep.subr.mxu0 0.0
    %317 = vmatpush1.msra.mxu0 0.0
    %318 = vmatprep.subr.mxu0 0.0
    %319 = vmatpush1.msra.mxu0 0.0
    %320 = vmatprep.subr.mxu0 0.0
    %321 = vmatpush1.msra.mxu0 0.0
    %322 = vmatprep.subr.mxu0 0.0
    %323 = vmatpush1.msra.mxu0 0.0
    %324 = vmatprep.subr.mxu0 0.0
    %325 = vmatpush1.msra.mxu0 0.0
    %326 = vmatprep.subr.mxu0 0.0
    %327 = vmatpush1.msra.mxu0 0.0
    %328 = vmatprep.mubr.f32.mxu0 0.0
    %329 = vmatmul.mubr.f32.gmra.mrb[0].mxu0 %v256
    %v330 = vpop.f32.mrb[0].mxu0
    %v331 = vadd.f32 %v247, %v330
    %v332 = vpop.f32.mrb[0].mxu0
    %333 = vmatprep.mubr.f32.mxu0 0.0
    %334 = vmatmul.mubr.f32.gmra.mrb[0].mxu0 %v259
    %v335 = vpop.f32.mrb[0].mxu0
    %v336 = vadd.f32 %v252, %v335
    %v337 = vpop.f32.mrb[0].mxu0
    %338 = vdwg.mxu0
    %v339 = vmax.f32 %v331, 0.0
    %v340 = vmax.f32 %v336, 0.0
    %v341 = vld [vmem:[%s6] sm:$0xff]
    %v342 = vld [vmem:[%s6 + $0x8] sm:$0xff]
    %v343 = vld [vmem:[%s6 + $0x10] sm:$0xff]
    %v344 = vld [vmem:[%s6 + $0x18] sm:$0xff]
    %v345 = vld [vmem:[%s6 + $0x20] sm:$0xff]
    %v346 = vld [vmem:[%s6 + $0x28] sm:$0xff]
    %v347 = vld [vmem:[%s6 + $0x30] sm:$0xff]
    %v348 = vld [vmem:[%s6 + $0x38] sm:$0xff]
    %v349 = vld [vmem:[%s6 + $0x40] sm:$0xff]
    %v350 = vld [vmem:[%s6 + $0x48] sm:$0xff]
    %v351 = vld [vmem:[%s6 + $0x50] sm:$0xff]
    %v352 = vld [vmem:[%s6 + $0x58] sm:$0xff]
    %v353 = vld [vmem:[%s6 + $0x60] sm:$0xff]
    %v354 = vld [vmem:[%s6 + $0x68] sm:$0xff]
    %v355 = vld [vmem:[%s6 + $0x70] sm:$0xff]
    %v356 = vld [vmem:[%s6 + $0x78] sm:$0xff]
    %v357 = vld [vmem:[%s6 + $0x80] sm:$0x7]
    %v358 = vld [vmem:[%s6 + $0x88] sm:$0x7]
    %vm359 = vcmask 547840
    %v361 = vsel %vm359, %v339, 0
    %v364 = vsel %vm359, %v340, 0
    %v367 = vsel %vm125, %v357, 0
    %v370 = vsel %vm125, %v358, 0
    %372 = vmatprep.subr.mxu0 %v342
    %373 = vmatpush1.msra.mxu0 %v341
    %374 = vmatprep.subr.mxu0 %v344
    %375 = vmatpush1.msra.mxu0 %v343
    %376 = vmatprep.subr.mxu0 %v346
    %377 = vmatpush1.msra.mxu0 %v345
    %378 = vmatprep.subr.mxu0 %v348
    %379 = vmatpush1.msra.mxu0 %v347
    %380 = vmatprep.subr.mxu0 %v350
    %381 = vmatpush1.msra.mxu0 %v349
    %382 = vmatprep.subr.mxu0 %v352
    %383 = vmatpush1.msra.mxu0 %v351
    %384 = vmatprep.subr.mxu0 %v354
    %385 = vmatpush1.msra.mxu0 %v353
    %386 = vmatprep.subr.mxu0 %v356
    %387 = vmatpush1.msra.mxu0 %v355
    %388 = vmatprep.subr.mxu0 %v370
    %389 = vmatpush1.msra.mxu0 %v367
    %390 = vmatprep.subr.mxu0 0.0
    %391 = vmatpush1.msra.mxu0 0.0
    %392 = vmatprep.subr.mxu0 0.0
    %393 = vmatpush1.msra.mxu0 0.0
    %394 = vmatprep.subr.mxu0 0.0
    %395 = vmatpush1.msra.mxu0 0.0
    %396 = vmatprep.subr.mxu0 0.0
    %397 = vmatpush1.msra.mxu0 0.0
    %398 = vmatprep.subr.mxu0 0.0
    %399 = vmatpush1.msra.mxu0 0.0
    %400 = vmatprep.subr.mxu0 0.0
    %401 = vmatpush1.msra.mxu0 0.0
    %402 = vmatprep.subr.mxu0 0.0
    %403 = vmatpush1.msra.mxu0 0.0
    %404 = vmatprep.subr.mxu0 0.0
    %405 = vmatpush1.msra.mxu0 0.0
    %406 = vmatprep.subr.mxu0 0.0
    %407 = vmatpush1.msra.mxu0 0.0
    %408 = vmatprep.subr.mxu0 0.0
    %409 = vmatpush1.msra.mxu0 0.0
    %410 = vmatprep.subr.mxu0 0.0
    %411 = vmatpush1.msra.mxu0 0.0
    %412 = vmatprep.subr.mxu0 0.0
    %413 = vmatpush1.msra.mxu0 0.0
    %414 = vmatprep.subr.mxu0 0.0
    %415 = vmatpush1.msra.mxu0 0.0
    %416 = vmatprep.subr.mxu0 0.0
    %417 = vmatpush1.msra.mxu0 0.0
    %418 = vmatprep.subr.mxu0 0.0
    %419 = vmatpush1.msra.mxu0 0.0
    %420 = vmatprep.subr.mxu0 0.0
    %421 = vmatpush1.msra.mxu0 0.0
    %422 = vmatprep.subr.mxu0 0.0
    %423 = vmatpush1.msra.mxu0 0.0
    %424 = vmatprep.subr.mxu0 0.0
    %425 = vmatpush1.msra.mxu0 0.0
    %426 = vmatprep.subr.mxu0 0.0
    %427 = vmatpush1.msra.mxu0 0.0
    %428 = vmatprep.subr.mxu0 0.0
    %429 = vmatpush1.msra.mxu0 0.0
    %430 = vmatprep.subr.mxu0 0.0
    %431 = vmatpush1.msra.mxu0 0.0
    %432 = vmatprep.subr.mxu0 0.0
    %433 = vmatpush1.msra.mxu0 0.0
    %434 = vmatprep.subr.mxu0 0.0
    %435 = vmatpush1.msra.mxu0 0.0
    %436 = vmatprep.mubr.f32.mxu0 0.0
    %437 = vmatmul.mubr.f32.gmra.mrb[0].mxu0 %v361
    %v438 = vpop.f32.mrb[0].mxu0
    %v439 = vadd.f32 0.0, %v438
    %v440 = vpop.f32.mrb[0].mxu0
    %v441 = vadd.f32 0.0, %v440
    %442 = vmatprep.mubr.f32.mxu0 0.0
    %443 = vmatmul.mubr.f32.gmra.mrb[0].mxu0 %v364
    %v444 = vpop.f32.mrb[0].mxu0
    %v445 = vadd.f32 0.0, %v444
    %v446 = vpop.f32.mrb[0].mxu0
    %v447 = vadd.f32 0.0, %v446
    %448 = vdwg.mxu0
    %451 = vrot.lane.b32.xlu0 %v439, 107
    %v452 = vpop.permute.xlu0 %451
    %453 = vrot.lane.b32.xlu0 %v445, 107
    %v454 = vpop.permute.xlu0 %453
    %457 = vrot.lane.b32.xlu0 %v439, 86
    %v458 = vpop.permute.xlu0 %457
    %459 = vrot.lane.b32.xlu0 %v445, 86
    %v460 = vpop.permute.xlu0 %459
    %463 = vrot.lane.b32.xlu0 %v439, 65
    %v464 = vpop.permute.xlu0 %463
    %465 = vrot.lane.b32.xlu0 %v445, 65
    %v466 = vpop.permute.xlu0 %465
    %469 = vrot.lane.b32.xlu0 %v439, 44
    %v470 = vpop.permute.xlu0 %469
    %471 = vrot.lane.b32.xlu0 %v445, 44
    %v472 = vpop.permute.xlu0 %471
    %475 = vrot.lane.b32.xlu0 %v439, 23
    %v476 = vpop.permute.xlu0 %475
    %477 = vrot.lane.b32.xlu0 %v445, 23
    %v478 = vpop.permute.xlu0 %477
    %483 = vrot.lane.b32.xlu0 %v439, 2
    %v484 = vpop.permute.xlu0 %483
    %485 = vrot.lane.b32.xlu0 %v441, 2
    %v486 = vpop.permute.xlu0 %485
    %487 = vrot.lane.b32.xlu0 %v445, 2
    %v488 = vpop.permute.xlu0 %487
    %489 = vrot.lane.b32.xlu0 %v447, 2
    %v490 = vpop.permute.xlu0 %489
    %vm491 = vcmask 15360
    %v492 = vsel %vm491, %v484, %v486
    %v493 = vsel %vm491, %v488, %v490
    %v496 = vld [vmem:[%s4] sm:$0xff]
    %v497 = vld [vmem:[%s4 + $0x8] sm:$0xff]
    %v498 = vld [vmem:[%s4 + $0x10] sm:$0xff]
    %v499 = vld [vmem:[%s4 + $0x18] sm:$0xff]
    %v500 = vld [vmem:[%s5] sm:$0xff]
    %v501 = vld [vmem:[%s5 + $0x8] sm:$0xff]
    %v502 = vld [vmem:[%s5 + $0x10] sm:$0xff]
    %v503 = vld [vmem:[%s5 + $0x18] sm:$0xff]
    %505 = vset.pattern.permute.xlu0 0
    %506 = vperm.xlu0 %505, %v500
    %v507 = vpop.permute.xlu0 %506
    %510 = vset.pattern.permute.xlu0 0
    %511 = vperm.xlu0 %510, %v501
    %v512 = vpop.permute.xlu0 %511
    %515 = vset.pattern.permute.xlu0 0
    %516 = vperm.xlu0 %515, %v502
    %v517 = vpop.permute.xlu0 %516
    %520 = vset.pattern.permute.xlu0 0
    %521 = vperm.xlu0 %520, %v503
    %v522 = vpop.permute.xlu0 %521
    %vm524 = vcmask 916480
    %v526 = vsel %vm524, %v496, 0
    %v529 = vsel %vm524, %v497, 0
    %v532 = vsel %vm524, %v498, 0
    %v535 = vsel %vm524, %v499, 0
    %537 = vmatprep.subr.mxu0 0.0
    %538 = vmatpush1.msra.mxu0 %v439
    %539 = vmatprep.subr.mxu0 0.0
    %540 = vmatpush1.msra.mxu0 %v445
    %541 = vmatprep.subr.mxu0 0.0
    %542 = vmatpush1.msra.mxu0 %v452
    %543 = vmatprep.subr.mxu0 0.0
    %544 = vmatpush1.msra.mxu0 %v454
    %545 = vmatprep.subr.mxu0 0.0
    %546 = vmatpush1.msra.mxu0 %v458
    %547 = vmatprep.subr.mxu0 0.0
    %548 = vmatpush1.msra.mxu0 %v460
    %549 = vmatprep.subr.mxu0 0.0
    %550 = vmatpush1.msra.mxu0 %v464
    %551 = vmatprep.subr.mxu0 0.0
    %552 = vmatpush1.msra.mxu0 %v466
    %553 = vmatprep.subr.mxu0 0.0
    %554 = vmatpush1.msra.mxu0 %v470
    %555 = vmatprep.subr.mxu0 0.0
    %556 = vmatpush1.msra.mxu0 %v472
    %557 = vmatprep.subr.mxu0 0.0
    %558 = vmatpush1.msra.mxu0 %v476
    %559 = vmatprep.subr.mxu0 0.0
    %560 = vmatpush1.msra.mxu0 %v478
    %561 = vmatprep.subr.mxu0 0.0
    %562 = vmatpush1.msra.mxu0 %v492
    %563 = vmatprep.subr.mxu0 0.0
    %564 = vmatpush1.msra.mxu0 %v493
    %565 = vmatprep.subr.mxu0 0.0
    %566 = vmatpush1.msra.mxu0 0.0
    %567 = vmatprep.subr.mxu0 0.0
    %568 = vmatpush1.msra.mxu0 0.0
    %569 = vmatprep.subr.mxu0 0.0
    %570 = vmatpush1.msra.mxu0 0.0
    %571 = vmatprep.subr.mxu0 0.0
    %572 = vmatpush1.msra.mxu0 0.0
    %573 = vmatprep.subr.mxu0 0.0
    %574 = vmatpush1.msra.mxu0 0.0
    %575 = vmatprep.subr.mxu0 0.0
    %576 = vmatpush1.msra.mxu0 0.0
    %577 = vmatprep.subr.mxu0 0.0
    %578 = vmatpush1.msra.mxu0 0.0
    %579 = vmatprep.subr.mxu0 0.0
    %580 = vmatpush1.msra.mxu0 0.0
    %581 = vmatprep.subr.mxu0 0.0
    %582 = vmatpush1.msra.mxu0 0.0
    %583 = vmatprep.subr.mxu0 0.0
    %584 = vmatpush1.msra.mxu0 0.0
    %585 = vmatprep.subr.mxu0 0.0
    %586 = vmatpush1.msra.mxu0 0.0
    %587 = vmatprep.subr.mxu0 0.0
    %588 = vmatpush1.msra.mxu0 0.0
    %589 = vmatprep.subr.mxu0 0.0
    %590 = vmatpush1.msra.mxu0 0.0
    %591 = vmatprep.subr.mxu0 0.0
    %592 = vmatpush1.msra.mxu0 0.0
    %593 = vmatprep.subr.mxu0 0.0
    %594 = vmatpush1.msra.mxu0 0.0
    %595 = vmatprep.subr.mxu0 0.0
    %596 = vmatpush1.msra.mxu0 0.0
    %597 = vmatprep.subr.mxu0 0.0
    %598 = vmatpush1.msra.mxu0 0.0
    %599 = vmatprep.subr.mxu0 0.0
    %600 = vmatpush1.msra.mxu0 0.0
    %601 = vmatprep.mubr.f32.mxu0 0.0
    %602 = vmatmul.mubr.f32.gmra.mrb[0].mxu0 %v526
    %v603 = vpop.f32.mrb[0].mxu0
    %v604 = vadd.f32 %v507, %v603
    %v605 = vpop.f32.mrb[0].mxu0
    %606 = vmatprep.mubr.f32.mxu0 0.0
    %607 = vmatmul.mubr.f32.gmra.mrb[0].mxu0 %v529
    %v608 = vpop.f32.mrb[0].mxu0
    %v609 = vadd.f32 %v512, %v608
    %v610 = vpop.f32.mrb[0].mxu0
    %611 = vmatprep.mubr.f32.mxu0 0.0
    %612 = vmatmul.mubr.f32.gmra.mrb[0].mxu0 %v532
    %v613 = vpop.f32.mrb[0].mxu0
    %v614 = vadd.f32 %v517, %v613
    %v615 = vpop.f32.mrb[0].mxu0
    %616 = vmatprep.mubr.f32.mxu0 0.0
    %617 = vmatmul.mubr.f32.gmra.mrb[0].mxu0 %v535
    %v618 = vpop.f32.mrb[0].mxu0
    %v619 = vadd.f32 %v522, %v618
    %v620 = vpop.f32.mrb[0].mxu0
    %621 = vdwg.mxu0
    %v622 = vmax.f32 %v604, 0.0
    %v623 = vmax.f32 %v609, 0.0
    %v624 = vmax.f32 %v614, 0.0
    %v625 = vmax.f32 %v619, 0.0
    %v627 = vrot.slane %v622, 1
    %628 = vrot.lane.b32.xlu0 %v627, 21
    %v629 = vpop.permute.xlu0 %628
    %v631 = vrot.slane %v622, 2
    %632 = vrot.lane.b32.xlu0 %v631, 42
    %v633 = vpop.permute.xlu0 %632
    %v635 = vrot.slane %v622, 3
    %636 = vrot.lane.b32.xlu0 %v635, 63
    %v637 = vpop.permute.xlu0 %636
    %v639 = vrot.slane %v622, 4
    %640 = vrot.lane.b32.xlu0 %v639, 84
    %v641 = vpop.permute.xlu0 %640
    %v643 = vrot.slane %v622, 5
    %644 = vrot.lane.b32.xlu0 %v643, 105
    %v645 = vpop.permute.xlu0 %644
    %v647 = vrot.slane %v622, 6
    %648 = vrot.lane.b32.xlu0 %v647, 126
    %v649 = vpop.permute.xlu0 %648
    %v651 = vrot.slane %v622, 7
    %652 = vrot.lane.b32.xlu0 %v651, 19
    %v653 = vpop.permute.xlu0 %652
    %656 = vrot.lane.b32.xlu0 %v623, 40
    %v657 = vpop.permute.xlu0 %656
    %v659 = vrot.slane %v623, 1
    %660 = vrot.lane.b32.xlu0 %v659, 61
    %v661 = vpop.permute.xlu0 %660
    %v663 = vrot.slane %v623, 2
    %664 = vrot.lane.b32.xlu0 %v663, 82
    %v665 = vpop.permute.xlu0 %664
    %v667 = vrot.slane %v623, 3
    %668 = vrot.lane.b32.xlu0 %v667, 103
    %v669 = vpop.permute.xlu0 %668
    %v671 = vrot.slane %v623, 4
    %672 = vrot.lane.b32.xlu0 %v671, 124
    %v673 = vpop.permute.xlu0 %672
    %v675 = vrot.slane %v623, 5
    %676 = vrot.lane.b32.xlu0 %v675, 17
    %v677 = vpop.permute.xlu0 %676
    %v679 = vrot.slane %v623, 6
    %680 = vrot.lane.b32.xlu0 %v679, 38
    %v681 = vpop.permute.xlu0 %680
    %v683 = vrot.slane %v623, 7
    %684 = vrot.lane.b32.xlu0 %v683, 59
    %v685 = vpop.permute.xlu0 %684
    %vm687 = vcmask 171008
    %v688 = vsel %vm687, %v622, %v629
    %vm689 = vcmask 343040
    %v690 = vsel %vm689, %v688, %v633
    %vm691 = vcmask 515072
    %v692 = vsel %vm691, %v690, %v637
    %vm693 = vcmask 687104
    %v694 = vsel %vm693, %v692, %v641
    %vm695 = vcmask 859136
    %v696 = vsel %vm695, %v694, %v645
    %v697 = vsel %vm83, %v696, %v649
    %vm698 = vcmask 154624
    %v699 = vsel %vm698, %v649, %v653
    %vm700 = vcmask 326656
    %v701 = vsel %vm700, %v699, %v657
    %vm702 = vcmask 498688
    %v703 = vsel %vm702, %v701, %v661
    %vm704 = vcmask 670720
    %v705 = vsel %vm704, %v703, %v665
    %vm706 = vcmask 842752
    %v707 = vsel %vm706, %v705, %v669
    %v708 = vsel %vm99, %v707, %v673
    %vm709 = vcmask 138240
    %v710 = vsel %vm709, %v673, %v677
    %vm711 = vcmask 310272
    %v712 = vsel %vm711, %v710, %v681
    %vm713 = vcmask 482304
    %v714 = vsel %vm713, %v712, %v685
    %v716 = vrot.slane %v624, 1
    %717 = vrot.lane.b32.xlu0 %v716, 21
    %v718 = vpop.permute.xlu0 %717
    %v720 = vrot.slane %v624, 2
    %721 = vrot.lane.b32.xlu0 %v720, 42
    %v722 = vpop.permute.xlu0 %721
    %v724 = vrot.slane %v624, 3
    %725 = vrot.lane.b32.xlu0 %v724, 63
    %v726 = vpop.permute.xlu0 %725
    %v728 = vrot.slane %v624, 4
    %729 = vrot.lane.b32.xlu0 %v728, 84
    %v730 = vpop.permute.xlu0 %729
    %v732 = vrot.slane %v624, 5
    %733 = vrot.lane.b32.xlu0 %v732, 105
    %v734 = vpop.permute.xlu0 %733
    %v736 = vrot.slane %v624, 6
    %737 = vrot.lane.b32.xlu0 %v736, 126
    %v738 = vpop.permute.xlu0 %737
    %v740 = vrot.slane %v624, 7
    %741 = vrot.lane.b32.xlu0 %v740, 19
    %v742 = vpop.permute.xlu0 %741
    %745 = vrot.lane.b32.xlu0 %v625, 40
    %v746 = vpop.permute.xlu0 %745
    %v748 = vrot.slane %v625, 1
    %749 = vrot.lane.b32.xlu0 %v748, 61
    %v750 = vpop.permute.xlu0 %749
    %v752 = vrot.slane %v625, 2
    %753 = vrot.lane.b32.xlu0 %v752, 82
    %v754 = vpop.permute.xlu0 %753
    %v756 = vrot.slane %v625, 3
    %757 = vrot.lane.b32.xlu0 %v756, 103
    %v758 = vpop.permute.xlu0 %757
    %v760 = vrot.slane %v625, 4
    %761 = vrot.lane.b32.xlu0 %v760, 124
    %v762 = vpop.permute.xlu0 %761
    %v764 = vrot.slane %v625, 5
    %765 = vrot.lane.b32.xlu0 %v764, 17
    %v766 = vpop.permute.xlu0 %765
    %v768 = vrot.slane %v625, 6
    %769 = vrot.lane.b32.xlu0 %v768, 38
    %v770 = vpop.permute.xlu0 %769
    %v772 = vrot.slane %v625, 7
    %773 = vrot.lane.b32.xlu0 %v772, 59
    %v774 = vpop.permute.xlu0 %773
    %v776 = vsel %vm687, %v624, %v718
    %v777 = vsel %vm689, %v776, %v722
    %v778 = vsel %vm691, %v777, %v726
    %v779 = vsel %vm693, %v778, %v730
    %v780 = vsel %vm695, %v779, %v734
    %v781 = vsel %vm83, %v780, %v738
    %v782 = vsel %vm698, %v738, %v742
    %v783 = vsel %vm700, %v782, %v746
    %v784 = vsel %vm702, %v783, %v750
    %v785 = vsel %vm704, %v784, %v754
    %v786 = vsel %vm706, %v785, %v758
    %v787 = vsel %vm99, %v786, %v762
    %v788 = vsel %vm709, %v762, %v766
    %v789 = vsel %vm711, %v788, %v770
    %v790 = vsel %vm713, %v789, %v774
    %794 = vrot.lane.b32.xlu0 %v781, 80
    %v795 = vpop.permute.xlu0 %794
    %796 = vrot.lane.b32.xlu0 %v787, 80
    %v797 = vpop.permute.xlu0 %796
    %798 = vrot.lane.b32.xlu0 %v790, 80
    %v799 = vpop.permute.xlu0 %798
    %vm800 = vcmask 654336
    %v801 = vsel %vm800, %v795, %v797
    %v802 = vsel %vm800, %v797, %v799
    %v806 = vsel %vm800, %v714, %v795
    %v807 = vld [vmem:[%s7] sm:$0xff]
    %v808 = vld [vmem:[%s7 + $0x8] sm:$0xff]
    %v809 = vld [vmem:[%s7 + $0x10] sm:$0xff]
    %v810 = vld [vmem:[%s7 + $0x18] sm:$0xff]
    %v811 = vld [vmem:[%s7 + $0x20] sm:$0xff]
    %v812 = vld [vmem:[%s7 + $0x28] sm:$0xff]
    %v813 = vld [vmem:[%s7 + $0x30] sm:$0xff]
    %v814 = vld [vmem:[%s7 + $0x38] sm:$0xff]
    %v815 = vld [vmem:[%s7 + $0x40] sm:$0xff]
    %v816 = vld [vmem:[%s7 + $0x48] sm:$0xff]
    %v817 = vld [vmem:[%s7 + $0x50] sm:$0xff]
    %v818 = vld [vmem:[%s7 + $0x58] sm:$0xff]
    %v819 = vld [vmem:[%s7 + $0x60] sm:$0xff]
    %v820 = vld [vmem:[%s7 + $0x68] sm:$0xff]
    %v821 = vld [vmem:[%s7 + $0x70] sm:$0xff]
    %v822 = vld [vmem:[%s7 + $0x78] sm:$0xff]
    %v823 = vld [vmem:[%s7 + $0x80] sm:$0xff]
    %v824 = vld [vmem:[%s7 + $0x88] sm:$0xff]
    %v825 = vld [vmem:[%s7 + $0x90] sm:$0xff]
    %v826 = vld [vmem:[%s7 + $0x98] sm:$0xff]
    %v827 = vld [vmem:[%s7 + $0xa0] sm:$0xff]
    %v828 = vld [vmem:[%s7 + $0xa8] sm:$0xff]
    %v829 = vld [vmem:[%s7 + $0xb0] sm:$0xff]
    %v830 = vld [vmem:[%s7 + $0xb8] sm:$0xff]
    %v831 = vld [vmem:[%s7 + $0xc0] sm:$0xff]
    %v832 = vld [vmem:[%s7 + $0xc8] sm:$0xff]
    %v833 = vld [vmem:[%s7 + $0xd0] sm:$0xff]
    %v834 = vld [vmem:[%s7 + $0xd8] sm:$0xff]
    %v835 = vld [vmem:[%s7 + $0xe0] sm:$0xff]
    %v836 = vld [vmem:[%s7 + $0xe8] sm:$0xff]
    %v837 = vld [vmem:[%s7 + $0xf0] sm:$0xff]
    %v838 = vld [vmem:[%s7 + $0xf8] sm:$0xff]
    %v839 = vld [vmem:[%s7 + $0x100] sm:$0xff]
    %v840 = vld [vmem:[%s7 + $0x108] sm:$0xff]
    %v841 = vld [vmem:[%s7 + $0x110] sm:$0xff]
    %v842 = vld [vmem:[%s7 + $0x118] sm:$0xff]
    %v843 = vld [vmem:[%s7 + $0x120] sm:$0xff]
    %v844 = vld [vmem:[%s7 + $0x128] sm:$0xff]
    %v845 = vld [vmem:[%s7 + $0x130] sm:$0xff]
    %v846 = vld [vmem:[%s7 + $0x138] sm:$0xff]
    %v847 = vld [vmem:[%s7 + $0x140] sm:$0xff]
    %v848 = vld [vmem:[%s7 + $0x148] sm:$0xff]
    %v849 = vld [vmem:[%s7 + $0x150] sm:$0xff]
    %v850 = vld [vmem:[%s7 + $0x158] sm:$0xff]
    %v851 = vld [vmem:[%s7 + $0x160] sm:$0xff]
    %v852 = vld [vmem:[%s7 + $0x168] sm:$0xff]
    %v853 = vld [vmem:[%s7 + $0x170] sm:$0xff]
    %v854 = vld [vmem:[%s7 + $0x178] sm:$0xff]
    %v855 = vld [vmem:[%s7 + $0x180] sm:$0xff]
    %v856 = vld [vmem:[%s7 + $0x188] sm:$0xff]
    %v857 = vld [vmem:[%s7 + $0x190] sm:$0xff]
    %v858 = vld [vmem:[%s7 + $0x198] sm:$0xff]
    %v859 = vld [vmem:[%s7 + $0x1a0] sm:$0xff]
    %v860 = vld [vmem:[%s7 + $0x1a8] sm:$0xff]
    %v861 = vld [vmem:[%s7 + $0x1b0] sm:$0xff]
    %v862 = vld [vmem:[%s7 + $0x1b8] sm:$0xff]
    %v863 = vld [vmem:[%s7 + $0x1c0] sm:$0xff]
    %v864 = vld [vmem:[%s7 + $0x1c8] sm:$0xff]
    %v865 = vld [vmem:[%s7 + $0x1d0] sm:$0xff]
    %v866 = vld [vmem:[%s7 + $0x1d8] sm:$0xff]
    %v867 = vld [vmem:[%s7 + $0x1e0] sm:$0xff]
    %v868 = vld [vmem:[%s7 + $0x1e8] sm:$0xff]
    %v869 = vld [vmem:[%s7 + $0x1f0] sm:$0xff]
    %v870 = vld [vmem:[%s7 + $0x1f8] sm:$0xff]
    %v871 = vld [vmem:[%s7 + $0x200] sm:$0xff]
    %v872 = vld [vmem:[%s7 + $0x208] sm:$0xff]
    %v873 = vld [vmem:[%s7 + $0x210] sm:$0xff]
    %v874 = vld [vmem:[%s7 + $0x218] sm:$0xff]
    %v875 = vld [vmem:[%s7 + $0x220] sm:$0xff]
    %v876 = vld [vmem:[%s7 + $0x228] sm:$0xff]
    %v877 = vld [vmem:[%s7 + $0x230] sm:$0xff]
    %v878 = vld [vmem:[%s7 + $0x238] sm:$0xff]
    %v879 = vld [vmem:[%s7 + $0x240] sm:$0xff]
    %v880 = vld [vmem:[%s7 + $0x248] sm:$0xff]
    %v881 = vld [vmem:[%s7 + $0x250] sm:$0xff]
    %v882 = vld [vmem:[%s7 + $0x258] sm:$0xff]
    %v883 = vld [vmem:[%s7 + $0x260] sm:$0xff]
    %v884 = vld [vmem:[%s7 + $0x268] sm:$0xff]
    %v885 = vld [vmem:[%s7 + $0x270] sm:$0xff]
    %v886 = vld [vmem:[%s7 + $0x278] sm:$0xff]
    %v887 = vld [vmem:[%s7 + $0x280] sm:$0xff]
    %v888 = vld [vmem:[%s7 + $0x288] sm:$0xff]
    %v889 = vld [vmem:[%s7 + $0x290] sm:$0xff]
    %v890 = vld [vmem:[%s7 + $0x298] sm:$0xff]
    %v891 = vld [vmem:[%s8] sm:$0x1]
    %vm892 = vcmask 261120
    %v893 = vsel %vm892, %v799, 0
    %895 = vmatprep.subr.mxu0 0.0
    %896 = vmatpush1.msra.mxu0 %v807
    %897 = vmatprep.subr.mxu0 0.0
    %898 = vmatpush1.msra.mxu0 %v808
    %899 = vmatprep.subr.mxu0 0.0
    %900 = vmatpush1.msra.mxu0 %v809
    %901 = vmatprep.subr.mxu0 0.0
    %902 = vmatpush1.msra.mxu0 %v810
    %903 = vmatprep.subr.mxu0 0.0
    %904 = vmatpush1.msra.mxu0 %v811
    %905 = vmatprep.subr.mxu0 0.0
    %906 = vmatpush1.msra.mxu0 %v812
    %907 = vmatprep.subr.mxu0 0.0
    %908 = vmatpush1.msra.mxu0 %v813
    %909 = vmatprep.subr.mxu0 0.0
    %910 = vmatpush1.msra.mxu0 %v814
    %911 = vmatprep.subr.mxu0 0.0
    %912 = vmatpush1.msra.mxu0 %v815
    %913 = vmatprep.subr.mxu0 0.0
    %914 = vmatpush1.msra.mxu0 %v816
    %915 = vmatprep.subr.mxu0 0.0
    %916 = vmatpush1.msra.mxu0 %v817
    %917 = vmatprep.subr.mxu0 0.0
    %918 = vmatpush1.msra.mxu0 %v818
    %919 = vmatprep.subr.mxu0 0.0
    %920 = vmatpush1.msra.mxu0 %v819
    %921 = vmatprep.subr.mxu0 0.0
    %922 = vmatpush1.msra.mxu0 %v820
    %923 = vmatprep.subr.mxu0 0.0
    %924 = vmatpush1.msra.mxu0 %v821
    %925 = vmatprep.subr.mxu0 0.0
    %926 = vmatpush1.msra.mxu0 %v822
    %927 = vmatprep.subr.mxu0 0.0
    %928 = vmatpush1.msra.mxu0 %v823
    %929 = vmatprep.subr.mxu0 0.0
    %930 = vmatpush1.msra.mxu0 %v824
    %931 = vmatprep.subr.mxu0 0.0
    %932 = vmatpush1.msra.mxu0 %v825
    %933 = vmatprep.subr.mxu0 0.0
    %934 = vmatpush1.msra.mxu0 %v826
    %935 = vmatprep.subr.mxu0 0.0
    %936 = vmatpush1.msra.mxu0 %v827
    %937 = vmatprep.subr.mxu0 0.0
    %938 = vmatpush1.msra.mxu0 %v828
    %939 = vmatprep.subr.mxu0 0.0
    %940 = vmatpush1.msra.mxu0 %v829
    %941 = vmatprep.subr.mxu0 0.0
    %942 = vmatpush1.msra.mxu0 %v830
    %943 = vmatprep.subr.mxu0 0.0
    %944 = vmatpush1.msra.mxu0 %v831
    %945 = vmatprep.subr.mxu0 0.0
    %946 = vmatpush1.msra.mxu0 %v832
    %947 = vmatprep.subr.mxu0 0.0
    %948 = vmatpush1.msra.mxu0 %v833
    %949 = vmatprep.subr.mxu0 0.0
    %950 = vmatpush1.msra.mxu0 %v834
    %951 = vmatprep.subr.mxu0 0.0
    %952 = vmatpush1.msra.mxu0 %v835
    %953 = vmatprep.subr.mxu0 0.0
    %954 = vmatpush1.msra.mxu0 %v836
    %955 = vmatprep.subr.mxu0 0.0
    %956 = vmatpush1.msra.mxu0 %v837
    %957 = vmatprep.subr.mxu0 0.0
    %958 = vmatpush1.msra.mxu0 %v838
    %959 = vmatprep.mubr.f32.mxu0 %v708
    %960 = vmatmul.mubr.f32.gmra.mrb[0].mxu0 %v697
    %v961 = vpop.f32.mrb[0].mxu0
    %v962 = vadd.f32 %v891, %v961
    %v963 = vpop.f32.mrb[0].mxu0
    %964 = vdwg.mxu0
    %965 = vmatprep.subr.mxu0 0.0
    %966 = vmatpush1.msra.mxu0 %v839
    %967 = vmatprep.subr.mxu0 0.0
    %968 = vmatpush1.msra.mxu0 %v840
    %969 = vmatprep.subr.mxu0 0.0
    %970 = vmatpush1.msra.mxu0 %v841
    %971 = vmatprep.subr.mxu0 0.0
    %972 = vmatpush1.msra.mxu0 %v842
    %973 = vmatprep.subr.mxu0 0.0
    %974 = vmatpush1.msra.mxu0 %v843
    %975 = vmatprep.subr.mxu0 0.0
    %976 = vmatpush1.msra.mxu0 %v844
    %977 = vmatprep.subr.mxu0 0.0
    %978 = vmatpush1.msra.mxu0 %v845
    %979 = vmatprep.subr.mxu0 0.0
    %980 = vmatpush1.msra.mxu0 %v846
    %981 = vmatprep.subr.mxu0 0.0
    %982 = vmatpush1.msra.mxu0 %v847
    %983 = vmatprep.subr.mxu0 0.0
    %984 = vmatpush1.msra.mxu0 %v848
    %985 = vmatprep.subr.mxu0 0.0
    %986 = vmatpush1.msra.mxu0 %v849
    %987 = vmatprep.subr.mxu0 0.0
    %988 = vmatpush1.msra.mxu0 %v850
    %989 = vmatprep.subr.mxu0 0.0
    %990 = vmatpush1.msra.mxu0 %v851
    %991 = vmatprep.subr.mxu0 0.0
    %992 = vmatpush1.msra.mxu0 %v852
    %993 = vmatprep.subr.mxu0 0.0
    %994 = vmatpush1.msra.mxu0 %v853
    %995 = vmatprep.subr.mxu0 0.0
    %996 = vmatpush1.msra.mxu0 %v854
    %997 = vmatprep.subr.mxu0 0.0
    %998 = vmatpush1.msra.mxu0 %v855
    %999 = vmatprep.subr.mxu0 0.0
    %1000 = vmatpush1.msra.mxu0 %v856
    %1001 = vmatprep.subr.mxu0 0.0
    %1002 = vmatpush1.msra.mxu0 %v857
    %1003 = vmatprep.subr.mxu0 0.0
    %1004 = vmatpush1.msra.mxu0 %v858
    %1005 = vmatprep.subr.mxu0 0.0
    %1006 = vmatpush1.msra.mxu0 %v859
    %1007 = vmatprep.subr.mxu0 0.0
    %1008 = vmatpush1.msra.mxu0 %v860
    %1009 = vmatprep.subr.mxu0 0.0
    %1010 = vmatpush1.msra.mxu0 %v861
    %1011 = vmatprep.subr.mxu0 0.0
    %1012 = vmatpush1.msra.mxu0 %v862
    %1013 = vmatprep.subr.mxu0 0.0
    %1014 = vmatpush1.msra.mxu0 %v863
    %1015 = vmatprep.subr.mxu0 0.0
    %1016 = vmatpush1.msra.mxu0 %v864
    %1017 = vmatprep.subr.mxu0 0.0
    %1018 = vmatpush1.msra.mxu0 %v865
    %1019 = vmatprep.subr.mxu0 0.0
    %1020 = vmatpush1.msra.mxu0 %v866
    %1021 = vmatprep.subr.mxu0 0.0
    %1022 = vmatpush1.msra.mxu0 %v867
    %1023 = vmatprep.subr.mxu0 0.0
    %1024 = vmatpush1.msra.mxu0 %v868
    %1025 = vmatprep.subr.mxu0 0.0
    %1026 = vmatpush1.msra.mxu0 %v869
    %1027 = vmatprep.subr.mxu0 0.0
    %1028 = vmatpush1.msra.mxu0 %v870
    %1029 = vmatprep.mubr.f32.mxu0 %v801
    %1030 = vmatmul.mubr.f32.gmra.mrb[0].mxu0 %v806
    %v1031 = vpop.f32.mrb[0].mxu0
    %v1032 = vadd.f32 %v962, %v1031
    %v1033 = vpop.f32.mrb[0].mxu0
    %1034 = vdwg.mxu0
    %1035 = vmatprep.subr.mxu0 0.0
    %1036 = vmatpush1.msra.mxu0 %v871
    %1037 = vmatprep.subr.mxu0 0.0
    %1038 = vmatpush1.msra.mxu0 %v872
    %1039 = vmatprep.subr.mxu0 0.0
    %1040 = vmatpush1.msra.mxu0 %v873
    %1041 = vmatprep.subr.mxu0 0.0
    %1042 = vmatpush1.msra.mxu0 %v874
    %1043 = vmatprep.subr.mxu0 0.0
    %1044 = vmatpush1.msra.mxu0 %v875
    %1045 = vmatprep.subr.mxu0 0.0
    %1046 = vmatpush1.msra.mxu0 %v876
    %1047 = vmatprep.subr.mxu0 0.0
    %1048 = vmatpush1.msra.mxu0 %v877
    %1049 = vmatprep.subr.mxu0 0.0
    %1050 = vmatpush1.msra.mxu0 %v878
    %1051 = vmatprep.subr.mxu0 0.0
    %1052 = vmatpush1.msra.mxu0 %v879
    %1053 = vmatprep.subr.mxu0 0.0
    %1054 = vmatpush1.msra.mxu0 %v880
    %1055 = vmatprep.subr.mxu0 0.0
    %1056 = vmatpush1.msra.mxu0 %v881
    %1057 = vmatprep.subr.mxu0 0.0
    %1058 = vmatpush1.msra.mxu0 %v882
    %1059 = vmatprep.subr.mxu0 0.0
    %1060 = vmatpush1.msra.mxu0 %v883
    %1061 = vmatprep.subr.mxu0 0.0
    %1062 = vmatpush1.msra.mxu0 %v884
    %1063 = vmatprep.subr.mxu0 0.0
    %1064 = vmatpush1.msra.mxu0 %v885
    %1065 = vmatprep.subr.mxu0 0.0
    %1066 = vmatpush1.msra.mxu0 %v886
    %1067 = vmatprep.subr.mxu0 0.0
    %1068 = vmatpush1.msra.mxu0 %v887
    %1069 = vmatprep.subr.mxu0 0.0
    %1070 = vmatpush1.msra.mxu0 %v888
    %1071 = vmatprep.subr.mxu0 0.0
    %1072 = vmatpush1.msra.mxu0 %v889
    %1073 = vmatprep.subr.mxu0 0.0
    %1074 = vmatpush1.msra.mxu0 %v890
    %1075 = vmatprep.subr.mxu0 0.0
    %1076 = vmatpush1.msra.mxu0 0.0
    %1077 = vmatprep.subr.mxu0 0.0
    %1078 = vmatpush1.msra.mxu0 0.0
    %1079 = vmatprep.subr.mxu0 0.0
    %1080 = vmatpush1.msra.mxu0 0.0
    %1081 = vmatprep.subr.mxu0 0.0
    %1082 = vmatpush1.msra.mxu0 0.0
    %1083 = vmatprep.subr.mxu0 0.0
    %1084 = vmatpush1.msra.mxu0 0.0
    %1085 = vmatprep.subr.mxu0 0.0
    %1086 = vmatpush1.msra.mxu0 0.0
    %1087 = vmatprep.subr.mxu0 0.0
    %1088 = vmatpush1.msra.mxu0 0.0
    %1089 = vmatprep.subr.mxu0 0.0
    %1090 = vmatpush1.msra.mxu0 0.0
    %1091 = vmatprep.subr.mxu0 0.0
    %1092 = vmatpush1.msra.mxu0 0.0
    %1093 = vmatprep.subr.mxu0 0.0
    %1094 = vmatpush1.msra.mxu0 0.0
    %1095 = vmatprep.subr.mxu0 0.0
    %1096 = vmatpush1.msra.mxu0 0.0
    %1097 = vmatprep.subr.mxu0 0.0
    %1098 = vmatpush1.msra.mxu0 0.0
    %1099 = vmatprep.mubr.f32.mxu0 %v893
    %1100 = vmatmul.mubr.f32.gmra.mrb[0].mxu0 %v802
    %v1101 = vpop.f32.mrb[0].mxu0
    %v1102 = vadd.f32 %v1032, %v1101
    %v1103 = vpop.f32.mrb[0].mxu0
    %1104 = vdwg.mxu0
    %v1105 = vld [vmem:[%s9] sm:$0xff]
    %v1106 = vld [vmem:[%s9 + $0x8] sm:$0xff]
    %v1107 = vld [vmem:[%s9 + $0x10] sm:$0xff]
    %v1108 = vld [vmem:[%s9 + $0x18] sm:$0xff]
    %v1109 = vld [vmem:[%s9 + $0x20] sm:$0xff]
    %v1110 = vld [vmem:[%s9 + $0x28] sm:$0xff]
    %v1111 = vld [vmem:[%s9 + $0x30] sm:$0xff]
    %v1112 = vld [vmem:[%s9 + $0x38] sm:$0xff]
    %v1113 = vld [vmem:[%s9 + $0x40] sm:$0xff]
    %v1114 = vld [vmem:[%s9 + $0x48] sm:$0xff]
    %v1115 = vld [vmem:[%s9 + $0x50] sm:$0xff]
    %v1116 = vld [vmem:[%s9 + $0x58] sm:$0xff]
    %v1117 = vld [vmem:[%s9 + $0x60] sm:$0xff]
    %v1118 = vld [vmem:[%s9 + $0x68] sm:$0xff]
    %v1119 = vld [vmem:[%s9 + $0x70] sm:$0xff]
    %v1120 = vld [vmem:[%s9 + $0x78] sm:$0xff]
    %v1121 = vld [vmem:[%s9 + $0x80] sm:$0xff]
    %v1122 = vld [vmem:[%s9 + $0x88] sm:$0xff]
    %v1123 = vld [vmem:[%s9 + $0x90] sm:$0xff]
    %v1124 = vld [vmem:[%s9 + $0x98] sm:$0xff]
    %v1125 = vld [vmem:[%s9 + $0xa0] sm:$0xff]
    %v1126 = vld [vmem:[%s9 + $0xa8] sm:$0xff]
    %v1127 = vld [vmem:[%s9 + $0xb0] sm:$0xff]
    %v1128 = vld [vmem:[%s9 + $0xb8] sm:$0xff]
    %v1129 = vld [vmem:[%s10] sm:$0x3f]
    %v1131 = vlaneseq
    %v1132 = vshrl.u32 %v1131, 7
    %v1133 = vsub.s32 0, %v1132
    %v1134 = vrot.slane %v1129, %v1133
    %v1135 = vlaneseq
    %v1136 = vshrl.u32 %v1135, 7
    %v1137 = vsub.s32 1, %v1136
    %v1138 = vrot.slane %v1129, %v1137
    %v1139 = vlaneseq
    %v1140 = vshrl.u32 %v1139, 7
    %v1141 = vsub.s32 2, %v1140
    %v1142 = vrot.slane %v1129, %v1141
    %v1143 = vlaneseq
    %v1144 = vshrl.u32 %v1143, 7
    %v1145 = vsub.s32 3, %v1144
    %v1146 = vrot.slane %v1129, %v1145
    %v1147 = vlaneseq
    %v1148 = vshrl.u32 %v1147, 7
    %v1149 = vsub.s32 4, %v1148
    %v1150 = vrot.slane %v1129, %v1149
    %v1151 = vlaneseq
    %v1152 = vshrl.u32 %v1151, 7
    %v1153 = vsub.s32 5, %v1152
    %v1154 = vrot.slane %v1129, %v1153
    %v1162 = vsel %vm892, %v1102, 0
    %1164 = vmatprep.subr.mxu0 %v1106
    %1165 = vmatpush1.msra.mxu0 %v1105
    %1166 = vmatprep.subr.mxu0 %v1112
    %1167 = vmatpush1.msra.mxu0 %v1111
    %1168 = vmatprep.subr.mxu0 %v1118
    %1169 = vmatpush1.msra.mxu0 %v1117
    %1170 = vmatprep.subr.mxu0 %v1124
    %1171 = vmatpush1.msra.mxu0 %v1123
    %1172 = vmatprep.subr.mxu0 0.0
    %1173 = vmatpush1.msra.mxu0 0.0
    %1174 = vmatprep.subr.mxu0 0.0
    %1175 = vmatpush1.msra.mxu0 0.0
    %1176 = vmatprep.subr.mxu0 0.0
    %1177 = vmatpush1.msra.mxu0 0.0
    %1178 = vmatprep.subr.mxu0 0.0
    %1179 = vmatpush1.msra.mxu0 0.0
    %1180 = vmatprep.subr.mxu0 0.0
    %1181 = vmatpush1.msra.mxu0 0.0
    %1182 = vmatprep.subr.mxu0 0.0
    %1183 = vmatpush1.msra.mxu0 0.0
    %1184 = vmatprep.subr.mxu0 0.0
    %1185 = vmatpush1.msra.mxu0 0.0
    %1186 = vmatprep.subr.mxu0 0.0
    %1187 = vmatpush1.msra.mxu0 0.0
    %1188 = vmatprep.subr.mxu0 0.0
    %1189 = vmatpush1.msra.mxu0 0.0
    %1190 = vmatprep.subr.mxu0 0.0
    %1191 = vmatpush1.msra.mxu0 0.0
    %1192 = vmatprep.subr.mxu0 0.0
    %1193 = vmatpush1.msra.mxu0 0.0
    %1194 = vmatprep.subr.mxu0 0.0
    %1195 = vmatpush1.msra.mxu0 0.0
    %1196 = vmatprep.subr.mxu0 0.0
    %1197 = vmatpush1.msra.mxu0 0.0
    %1198 = vmatprep.subr.mxu0 0.0
    %1199 = vmatpush1.msra.mxu0 0.0
    %1200 = vmatprep.subr.mxu0 0.0
    %1201 = vmatpush1.msra.mxu0 0.0
    %1202 = vmatprep.subr.mxu0 0.0
    %1203 = vmatpush1.msra.mxu0 0.0
    %1204 = vmatprep.subr.mxu0 0.0
    %1205 = vmatpush1.msra.mxu0 0.0
    %1206 = vmatprep.subr.mxu0 0.0
    %1207 = vmatpush1.msra.mxu0 0.0
    %1208 = vmatprep.subr.mxu0 0.0
    %1209 = vmatpush1.msra.mxu0 0.0
    %1210 = vmatprep.subr.mxu0 0.0
    %1211 = vmatpush1.msra.mxu0 0.0
    %1212 = vmatprep.subr.mxu0 0.0
    %1213 = vmatpush1.msra.mxu0 0.0
    %1214 = vmatprep.subr.mxu0 0.0
    %1215 = vmatpush1.msra.mxu0 0.0
    %1216 = vmatprep.subr.mxu0 0.0
    %1217 = vmatpush1.msra.mxu0 0.0
    %1218 = vmatprep.subr.mxu0 0.0
    %1219 = vmatpush1.msra.mxu0 0.0
    %1220 = vmatprep.subr.mxu0 0.0
    %1221 = vmatpush1.msra.mxu0 0.0
    %1222 = vmatprep.subr.mxu0 0.0
    %1223 = vmatpush1.msra.mxu0 0.0
    %1224 = vmatprep.subr.mxu0 0.0
    %1225 = vmatpush1.msra.mxu0 0.0
    %1226 = vmatprep.subr.mxu0 0.0
    %1227 = vmatpush1.msra.mxu0 0.0
    %1228 = vmatprep.mubr.f32.mxu0 0.0
    %1229 = vmatmul.mubr.f32.gmra.mrb[0].mxu0 %v1162
    %v1230 = vpop.f32.mrb[0].mxu0
    %v1231 = vadd.f32 %v1134, %v1230
    %v1232 = vpop.f32.mrb[0].mxu0
    %v1233 = vadd.f32 %v1138, %v1232
    %1234 = vdwg.mxu0
    %1235 = vmatprep.subr.mxu0 %v1108
    %1236 = vmatpush1.msra.mxu0 %v1107
    %1237 = vmatprep.subr.mxu0 %v1114
    %1238 = vmatpush1.msra.mxu0 %v1113
    %1239 = vmatprep.subr.mxu0 %v1120
    %1240 = vmatpush1.msra.mxu0 %v1119
    %1241 = vmatprep.subr.mxu0 %v1126
    %1242 = vmatpush1.msra.mxu0 %v1125
    %1243 = vmatprep.subr.mxu0 0.0
    %1244 = vmatpush1.msra.mxu0 0.0
    %1245 = vmatprep.subr.mxu0 0.0
    %1246 = vmatpush1.msra.mxu0 0.0
    %1247 = vmatprep.subr.mxu0 0.0
    %1248 = vmatpush1.msra.mxu0 0.0
    %1249 = vmatprep.subr.mxu0 0.0
    %1250 = vmatpush1.msra.mxu0 0.0
    %1251 = vmatprep.subr.mxu0 0.0
    %1252 = vmatpush1.msra.mxu0 0.0
    %1253 = vmatprep.subr.mxu0 0.0
    %1254 = vmatpush1.msra.mxu0 0.0
    %1255 = vmatprep.subr.mxu0 0.0
    %1256 = vmatpush1.msra.mxu0 0.0
    %1257 = vmatprep.subr.mxu0 0.0
    %1258 = vmatpush1.msra.mxu0 0.0
    %1259 = vmatprep.subr.mxu0 0.0
    %1260 = vmatpush1.msra.mxu0 0.0
    %1261 = vmatprep.subr.mxu0 0.0
    %1262 = vmatpush1.msra.mxu0 0.0
    %1263 = vmatprep.subr.mxu0 0.0
    %1264 = vmatpush1.msra.mxu0 0.0
    %1265 = vmatprep.subr.mxu0 0.0
    %1266 = vmatpush1.msra.mxu0 0.0
    %1267 = vmatprep.subr.mxu0 0.0
    %1268 = vmatpush1.msra.mxu0 0.0
    %1269 = vmatprep.subr.mxu0 0.0
    %1270 = vmatpush1.msra.mxu0 0.0
    %1271 = vmatprep.subr.mxu0 0.0
    %1272 = vmatpush1.msra.mxu0 0.0
    %1273 = vmatprep.subr.mxu0 0.0
    %1274 = vmatpush1.msra.mxu0 0.0
    %1275 = vmatprep.subr.mxu0 0.0
    %1276 = vmatpush1.msra.mxu0 0.0
    %1277 = vmatprep.subr.mxu0 0.0
    %1278 = vmatpush1.msra.mxu0 0.0
    %1279 = vmatprep.subr.mxu0 0.0
    %1280 = vmatpush1.msra.mxu0 0.0
    %1281 = vmatprep.subr.mxu0 0.0
    %1282 = vmatpush1.msra.mxu0 0.0
    %1283 = vmatprep.subr.mxu0 0.0
    %1284 = vmatpush1.msra.mxu0 0.0
    %1285 = vmatprep.subr.mxu0 0.0
    %1286 = vmatpush1.msra.mxu0 0.0
    %1287 = vmatprep.subr.mxu0 0.0
    %1288 = vmatpush1.msra.mxu0 0.0
    %1289 = vmatprep.subr.mxu0 0.0
    %1290 = vmatpush1.msra.mxu0 0.0
    %1291 = vmatprep.subr.mxu0 0.0
    %1292 = vmatpush1.msra.mxu0 0.0
    %1293 = vmatprep.subr.mxu0 0.0
    %1294 = vmatpush1.msra.mxu0 0.0
    %1295 = vmatprep.subr.mxu0 0.0
    %1296 = vmatpush1.msra.mxu0 0.0
    %1297 = vmatprep.subr.mxu0 0.0
    %1298 = vmatpush1.msra.mxu0 0.0
    %1299 = vmatprep.mubr.f32.mxu0 0.0
    %1300 = vmatmul.mubr.f32.gmra.mrb[0].mxu0 %v1162
    %v1301 = vpop.f32.mrb[0].mxu0
    %v1302 = vadd.f32 %v1142, %v1301
    %v1303 = vpop.f32.mrb[0].mxu0
    %v1304 = vadd.f32 %v1146, %v1303
    %1305 = vdwg.mxu0
    %1306 = vmatprep.subr.mxu0 %v1110
    %1307 = vmatpush1.msra.mxu0 %v1109
    %1308 = vmatprep.subr.mxu0 %v1116
    %1309 = vmatpush1.msra.mxu0 %v1115
    %1310 = vmatprep.subr.mxu0 %v1122
    %1311 = vmatpush1.msra.mxu0 %v1121
    %1312 = vmatprep.subr.mxu0 %v1128
    %1313 = vmatpush1.msra.mxu0 %v1127
    %1314 = vmatprep.subr.mxu0 0.0
    %1315 = vmatpush1.msra.mxu0 0.0
    %1316 = vmatprep.subr.mxu0 0.0
    %1317 = vmatpush1.msra.mxu0 0.0
    %1318 = vmatprep.subr.mxu0 0.0
    %1319 = vmatpush1.msra.mxu0 0.0
    %1320 = vmatprep.subr.mxu0 0.0
    %1321 = vmatpush1.msra.mxu0 0.0
    %1322 = vmatprep.subr.mxu0 0.0
    %1323 = vmatpush1.msra.mxu0 0.0
    %1324 = vmatprep.subr.mxu0 0.0
    %1325 = vmatpush1.msra.mxu0 0.0
    %1326 = vmatprep.subr.mxu0 0.0
    %1327 = vmatpush1.msra.mxu0 0.0
    %1328 = vmatprep.subr.mxu0 0.0
    %1329 = vmatpush1.msra.mxu0 0.0
    %1330 = vmatprep.subr.mxu0 0.0
    %1331 = vmatpush1.msra.mxu0 0.0
    %1332 = vmatprep.subr.mxu0 0.0
    %1333 = vmatpush1.msra.mxu0 0.0
    %1334 = vmatprep.subr.mxu0 0.0
    %1335 = vmatpush1.msra.mxu0 0.0
    %1336 = vmatprep.subr.mxu0 0.0
    %1337 = vmatpush1.msra.mxu0 0.0
    %1338 = vmatprep.subr.mxu0 0.0
    %1339 = vmatpush1.msra.mxu0 0.0
    %1340 = vmatprep.subr.mxu0 0.0
    %1341 = vmatpush1.msra.mxu0 0.0
    %1342 = vmatprep.subr.mxu0 0.0
    %1343 = vmatpush1.msra.mxu0 0.0
    %1344 = vmatprep.subr.mxu0 0.0
    %1345 = vmatpush1.msra.mxu0 0.0
    %1346 = vmatprep.subr.mxu0 0.0
    %1347 = vmatpush1.msra.mxu0 0.0
    %1348 = vmatprep.subr.mxu0 0.0
    %1349 = vmatpush1.msra.mxu0 0.0
    %1350 = vmatprep.subr.mxu0 0.0
    %1351 = vmatpush1.msra.mxu0 0.0
    %1352 = vmatprep.subr.mxu0 0.0
    %1353 = vmatpush1.msra.mxu0 0.0
    %1354 = vmatprep.subr.mxu0 0.0
    %1355 = vmatpush1.msra.mxu0 0.0
    %1356 = vmatprep.subr.mxu0 0.0
    %1357 = vmatpush1.msra.mxu0 0.0
    %1358 = vmatprep.subr.mxu0 0.0
    %1359 = vmatpush1.msra.mxu0 0.0
    %1360 = vmatprep.subr.mxu0 0.0
    %1361 = vmatpush1.msra.mxu0 0.0
    %1362 = vmatprep.subr.mxu0 0.0
    %1363 = vmatpush1.msra.mxu0 0.0
    %1364 = vmatprep.subr.mxu0 0.0
    %1365 = vmatpush1.msra.mxu0 0.0
    %1366 = vmatprep.subr.mxu0 0.0
    %1367 = vmatpush1.msra.mxu0 0.0
    %1368 = vmatprep.subr.mxu0 0.0
    %1369 = vmatpush1.msra.mxu0 0.0
    %1370 = vmatprep.mubr.f32.mxu0 0.0
    %1371 = vmatmul.mubr.f32.gmra.mrb[0].mxu0 %v1162
    %v1372 = vpop.f32.mrb[0].mxu0
    %v1373 = vadd.f32 %v1150, %v1372
    %v1374 = vpop.f32.mrb[0].mxu0
    %v1375 = vadd.f32 %v1154, %v1374
    %1376 = vdwg.mxu0
    %v1377 = vmax.f32 %v1231, 0.0
    %v1378 = vmax.f32 %v1233, 0.0
    %v1379 = vmax.f32 %v1302, 0.0
    %v1380 = vmax.f32 %v1304, 0.0
    %v1381 = vmax.f32 %v1373, 0.0
    %v1382 = vmax.f32 %v1375, 0.0
    %v1384 = vrot.slane %v1377, 7
    %1385 = vrot.lane.b32.xlu0 %v1384, 107
    %v1386 = vpop.permute.xlu0 %1385
    %v1388 = vrot.slane %v1377, 6
    %1389 = vrot.lane.b32.xlu0 %v1388, 86
    %v1390 = vpop.permute.xlu0 %1389
    %v1392 = vrot.slane %v1377, 5
    %1393 = vrot.lane.b32.xlu0 %v1392, 65
    %v1394 = vpop.permute.xlu0 %1393
    %v1396 = vrot.slane %v1377, 4
    %1397 = vrot.lane.b32.xlu0 %v1396, 44
    %v1398 = vpop.permute.xlu0 %1397
    %v1400 = vrot.slane %v1377, 3
    %1401 = vrot.lane.b32.xlu0 %v1400, 23
    %v1402 = vpop.permute.xlu0 %1401
    %v1405 = vrot.slane %v1377, 2
    %v1406 = vrot.slane %v1378, 2
    %1407 = vrot.lane.b32.xlu0 %v1405, 2
    %v1408 = vpop.permute.xlu0 %1407
    %1409 = vrot.lane.b32.xlu0 %v1406, 2
    %v1410 = vpop.permute.xlu0 %1409
    %v1411 = vsel %vm491, %v1408, %v1410
    %v1413 = vrot.slane %v1378, 1
    %1414 = vrot.lane.b32.xlu0 %v1413, 109
    %v1415 = vpop.permute.xlu0 %1414
    %1417 = vrot.lane.b32.xlu0 %v1378, 88
    %v1418 = vpop.permute.xlu0 %1417
    %v1420 = vrot.slane %v1378, 7
    %1421 = vrot.lane.b32.xlu0 %v1420, 67
    %v1422 = vpop.permute.xlu0 %1421
    %v1424 = vrot.slane %v1378, 6
    %1425 = vrot.lane.b32.xlu0 %v1424, 46
    %v1426 = vpop.permute.xlu0 %1425
    %v1428 = vrot.slane %v1378, 5
    %1429 = vrot.lane.b32.xlu0 %v1428, 25
    %v1430 = vpop.permute.xlu0 %1429
    %v1433 = vrot.slane %v1378, 4
    %v1434 = vrot.slane %v1379, 4
    %1435 = vrot.lane.b32.xlu0 %v1433, 4
    %v1436 = vpop.permute.xlu0 %1435
    %1437 = vrot.lane.b32.xlu0 %v1434, 4
    %v1438 = vpop.permute.xlu0 %1437
    %vm1439 = vcmask 31744
    %v1440 = vsel %vm1439, %v1436, %v1438
    %v1442 = vrot.slane %v1379, 3
    %1443 = vrot.lane.b32.xlu0 %v1442, 111
    %v1444 = vpop.permute.xlu0 %1443
    %v1446 = vrot.slane %v1379, 2
    %1447 = vrot.lane.b32.xlu0 %v1446, 90
    %v1448 = vpop.permute.xlu0 %1447
    %v1450 = vrot.slane %v1379, 1
    %1451 = vrot.lane.b32.xlu0 %v1450, 69
    %v1452 = vpop.permute.xlu0 %1451
    %v1454 = vsel %vm119, %v1377, %v1386
    %v1455 = vsel %vm122, %v1454, %v1390
    %v1456 = vsel %vm125, %v1455, %v1394
    %v1457 = vsel %vm128, %v1456, %v1398
    %v1458 = vsel %vm131, %v1457, %v1402
    %v1459 = vsel %vm134, %v1458, %v1411
    %v1460 = vsel %vm166, %v1459, %v1415
    %v1461 = vsel %vm119, %v1418, %v1422
    %v1462 = vsel %vm122, %v1461, %v1426
    %v1463 = vsel %vm125, %v1462, %v1430
    %v1464 = vsel %vm128, %v1463, %v1440
    %v1465 = vsel %vm131, %v1464, %v1444
    %v1466 = vsel %vm134, %v1465, %v1448
    %v1467 = vsel %vm166, %v1466, %v1452
    %v1468 = vrot.slane %v1379, 7
    %1469 = vrot.lane.b32.xlu0 %v1468, 107
    %v1470 = vpop.permute.xlu0 %1469
    %v1473 = vrot.slane %v1379, 6
    %v1474 = vrot.slane %v1380, 6
    %1475 = vrot.lane.b32.xlu0 %v1473, 86
    %v1476 = vpop.permute.xlu0 %1475
    %1477 = vrot.lane.b32.xlu0 %v1474, 86
    %v1478 = vpop.permute.xlu0 %1477
    %vm1479 = vcmask 703488
    %v1480 = vsel %vm1479, %v1476, %v1478
    %v1482 = vrot.slane %v1380, 5
    %1483 = vrot.lane.b32.xlu0 %v1482, 65
    %v1484 = vpop.permute.xlu0 %1483
    %v1486 = vrot.slane %v1380, 4
    %1487 = vrot.lane.b32.xlu0 %v1486, 44
    %v1488 = vpop.permute.xlu0 %1487
    %v1490 = vrot.slane %v1380, 3
    %1491 = vrot.lane.b32.xlu0 %v1490, 23
    %v1492 = vpop.permute.xlu0 %1491
    %v1494 = vrot.slane %v1380, 2
    %1495 = vrot.lane.b32.xlu0 %v1494, 2
    %v1496 = vpop.permute.xlu0 %1495
    %v1498 = vrot.slane %v1380, 1
    %1499 = vrot.lane.b32.xlu0 %v1498, 109
    %v1500 = vpop.permute.xlu0 %1499
    %1503 = vrot.lane.b32.xlu0 %v1380, 88
    %v1504 = vpop.permute.xlu0 %1503
    %1505 = vrot.lane.b32.xlu0 %v1381, 88
    %v1506 = vpop.permute.xlu0 %1505
    %vm1507 = vcmask 719872
    %v1508 = vsel %vm1507, %v1504, %v1506
    %v1510 = vrot.slane %v1381, 7
    %1511 = vrot.lane.b32.xlu0 %v1510, 67
    %v1512 = vpop.permute.xlu0 %1511
    %v1514 = vrot.slane %v1381, 6
    %1515 = vrot.lane.b32.xlu0 %v1514, 46
    %v1516 = vpop.permute.xlu0 %1515
    %v1518 = vrot.slane %v1381, 5
    %1519 = vrot.lane.b32.xlu0 %v1518, 25
    %v1520 = vpop.permute.xlu0 %1519
    %v1522 = vrot.slane %v1381, 4
    %1523 = vrot.lane.b32.xlu0 %v1522, 4
    %v1524 = vpop.permute.xlu0 %1523
    %v1526 = vrot.slane %v1381, 3
    %1527 = vrot.lane.b32.xlu0 %v1526, 111
    %v1528 = vpop.permute.xlu0 %1527
    %v1531 = vrot.slane %v1381, 2
    %v1532 = vrot.slane %v1382, 2
    %1533 = vrot.lane.b32.xlu0 %v1531, 90
    %v1534 = vpop.permute.xlu0 %1533
    %1535 = vrot.lane.b32.xlu0 %v1532, 90
    %v1536 = vpop.permute.xlu0 %1535
    %vm1537 = vcmask 736256
    %v1538 = vsel %vm1537, %v1534, %v1536
    %v1540 = vrot.slane %v1382, 1
    %1541 = vrot.lane.b32.xlu0 %v1540, 69
    %v1542 = vpop.permute.xlu0 %1541
    %v1544 = vsel %vm119, %v1379, %v1470
    %v1545 = vsel %vm122, %v1544, %v1480
    %v1546 = vsel %vm125, %v1545, %v1484
    %v1547 = vsel %vm128, %v1546, %v1488
    %v1548 = vsel %vm131, %v1547, %v1492
    %v1549 = vsel %vm134, %v1548, %v1496
    %v1550 = vsel %vm166, %v1549, %v1500
    %v1551 = vsel %vm119, %v1508, %v1512
    %v1552 = vsel %vm122, %v1551, %v1516
    %v1553 = vsel %vm125, %v1552, %v1520
    %v1554 = vsel %vm128, %v1553, %v1524
    %v1555 = vsel %vm131, %v1554, %v1528
    %v1556 = vsel %vm134, %v1555, %v1538
    %v1557 = vsel %vm166, %v1556, %v1542
    %1560 = vrot.lane.b32.xlu0 %v1550, 48
    %v1561 = vpop.permute.xlu0 %1560
    %1562 = vrot.lane.b32.xlu0 %v1557, 48
    %v1563 = vpop.permute.xlu0 %1562
    %v1566 = vld [vmem:[%s11] sm:$0xff]
    %v1567 = vld [vmem:[%s11 + $0x8] sm:$0xff]
    %v1568 = vld [vmem:[%s11 + $0x10] sm:$0xff]
    %v1569 = vld [vmem:[%s11 + $0x18] sm:$0xff]
    %v1570 = vld [vmem:[%s11 + $0x20] sm:$0xff]
    %v1571 = vld [vmem:[%s11 + $0x28] sm:$0xff]
    %v1572 = vld [vmem:[%s11 + $0x30] sm:$0xff]
    %v1573 = vld [vmem:[%s11 + $0x38] sm:$0xff]
    %v1574 = vld [vmem:[%s11 + $0x40] sm:$0xff]
    %v1575 = vld [vmem:[%s11 + $0x48] sm:$0xff]
    %v1576 = vld [vmem:[%s11 + $0x50] sm:$0xff]
    %v1577 = vld [vmem:[%s11 + $0x58] sm:$0xff]
    %v1578 = vld [vmem:[%s11 + $0x60] sm:$0xff]
    %v1579 = vld [vmem:[%s11 + $0x68] sm:$0xff]
    %v1581 = vsel %vm892, %v1566, 0
    %v1584 = vsel %vm892, %v1567, 0
    %v1587 = vsel %vm892, %v1568, 0
    %v1590 = vsel %vm892, %v1569, 0
    %v1593 = vsel %vm892, %v1570, 0
    %v1596 = vsel %vm892, %v1571, 0
    %v1599 = vsel %vm892, %v1572, 0
    %v1602 = vsel %vm892, %v1573, 0
    %v1605 = vsel %vm892, %v1574, 0
    %v1608 = vsel %vm892, %v1575, 0
    %v1611 = vsel %vm892, %v1576, 0
    %v1614 = vsel %vm892, %v1577, 0
    %v1617 = vsel %vm892, %v1578, 0
    %v1620 = vsel %vm892, %v1579, 0
    %1622 = vmatprep.subr.mxu0 0.0
    %1623 = vmatpush1.msra.mxu0 %v1460
    %1624 = vmatprep.subr.mxu0 0.0
    %1625 = vmatpush1.msra.mxu0 %v1467
    %1626 = vmatprep.subr.mxu0 0.0
    %1627 = vmatpush1.msra.mxu0 %v1561
    %1628 = vmatprep.subr.mxu0 0.0
    %1629 = vmatpush1.msra.mxu0 %v1563
    %1630 = vmatprep.subr.mxu0 0.0
    %1631 = vmatpush1.msra.mxu0 0.0
    %1632 = vmatprep.subr.mxu0 0.0
    %1633 = vmatpush1.msra.mxu0 0.0
    %1634 = vmatprep.subr.mxu0 0.0
    %1635 = vmatpush1.msra.mxu0 0.0
    %1636 = vmatprep.subr.mxu0 0.0
    %1637 = vmatpush1.msra.mxu0 0.0
    %1638 = vmatprep.subr.mxu0 0.0
    %1639 = vmatpush1.msra.mxu0 0.0
    %1640 = vmatprep.subr.mxu0 0.0
    %1641 = vmatpush1.msra.mxu0 0.0
    %1642 = vmatprep.subr.mxu0 0.0
    %1643 = vmatpush1.msra.mxu0 0.0
    %1644 = vmatprep.subr.mxu0 0.0
    %1645 = vmatpush1.msra.mxu0 0.0
    %1646 = vmatprep.subr.mxu0 0.0
    %1647 = vmatpush1.msra.mxu0 0.0
    %1648 = vmatprep.subr.mxu0 0.0
    %1649 = vmatpush1.msra.mxu0 0.0
    %1650 = vmatprep.subr.mxu0 0.0
    %1651 = vmatpush1.msra.mxu0 0.0
    %1652 = vmatprep.subr.mxu0 0.0
    %1653 = vmatpush1.msra.mxu0 0.0
    %1654 = vmatprep.subr.mxu0 0.0
    %1655 = vmatpush1.msra.mxu0 0.0
    %1656 = vmatprep.subr.mxu0 0.0
    %1657 = vmatpush1.msra.mxu0 0.0
    %1658 = vmatprep.subr.mxu0 0.0
    %1659 = vmatpush1.msra.mxu0 0.0
    %1660 = vmatprep.subr.mxu0 0.0
    %1661 = vmatpush1.msra.mxu0 0.0
    %1662 = vmatprep.subr.mxu0 0.0
    %1663 = vmatpush1.msra.mxu0 0.0
    %1664 = vmatprep.subr.mxu0 0.0
    %1665 = vmatpush1.msra.mxu0 0.0
    %1666 = vmatprep.subr.mxu0 0.0
    %1667 = vmatpush1.msra.mxu0 0.0
    %1668 = vmatprep.subr.mxu0 0.0
    %1669 = vmatpush1.msra.mxu0 0.0
    %1670 = vmatprep.subr.mxu0 0.0
    %1671 = vmatpush1.msra.mxu0 0.0
    %1672 = vmatprep.subr.mxu0 0.0
    %1673 = vmatpush1.msra.mxu0 0.0
    %1674 = vmatprep.subr.mxu0 0.0
    %1675 = vmatpush1.msra.mxu0 0.0
    %1676 = vmatprep.subr.mxu0 0.0
    %1677 = vmatpush1.msra.mxu0 0.0
    %1678 = vmatprep.subr.mxu0 0.0
    %1679 = vmatpush1.msra.mxu0 0.0
    %1680 = vmatprep.subr.mxu0 0.0
    %1681 = vmatpush1.msra.mxu0 0.0
    %1682 = vmatprep.subr.mxu0 0.0
    %1683 = vmatpush1.msra.mxu0 0.0
    %1684 = vmatprep.subr.mxu0 0.0
    %1685 = vmatpush1.msra.mxu0 0.0
    %1686 = vmatprep.mubr.f32.mxu0 0.0
    %1687 = vmatmul.mubr.f32.gmra.mrb[0].mxu0 %v1581
    %v1688 = vpop.f32.mrb[0].mxu0
    %v1689 = vadd.f32 0.0, %v1688
    %v1690 = vpop.f32.mrb[0].mxu0
    %1691 = vmatprep.mubr.f32.mxu0 0.0
    %1692 = vmatmul.mubr.f32.gmra.mrb[0].mxu0 %v1584
    %v1693 = vpop.f32.mrb[0].mxu0
    %v1694 = vadd.f32 0.0, %v1693
    %v1695 = vpop.f32.mrb[0].mxu0
    %1696 = vmatprep.mubr.f32.mxu0 0.0
    %1697 = vmatmul.mubr.f32.gmra.mrb[0].mxu0 %v1587
    %v1698 = vpop.f32.mrb[0].mxu0
    %v1699 = vadd.f32 0.0, %v1698
    %v1700 = vpop.f32.mrb[0].mxu0
    %1701 = vmatprep.mubr.f32.mxu0 0.0
    %1702 = vmatmul.mubr.f32.gmra.mrb[0].mxu0 %v1590
    %v1703 = vpop.f32.mrb[0].mxu0
    %v1704 = vadd.f32 0.0, %v1703
    %v1705 = vpop.f32.mrb[0].mxu0
    %1706 = vmatprep.mubr.f32.mxu0 0.0
    %1707 = vmatmul.mubr.f32.gmra.mrb[0].mxu0 %v1593
    %v1708 = vpop.f32.mrb[0].mxu0
    %v1709 = vadd.f32 0.0, %v1708
    %v1710 = vpop.f32.mrb[0].mxu0
    %1711 = vmatprep.mubr.f32.mxu0 0.0
    %1712 = vmatmul.mubr.f32.gmra.mrb[0].mxu0 %v1596
    %v1713 = vpop.f32.mrb[0].mxu0
    %v1714 = vadd.f32 0.0, %v1713
    %v1715 = vpop.f32.mrb[0].mxu0
    %1716 = vmatprep.mubr.f32.mxu0 0.0
    %1717 = vmatmul.mubr.f32.gmra.mrb[0].mxu0 %v1599
    %v1718 = vpop.f32.mrb[0].mxu0
    %v1719 = vadd.f32 0.0, %v1718
    %v1720 = vpop.f32.mrb[0].mxu0
    %1721 = vmatprep.mubr.f32.mxu0 0.0
    %1722 = vmatmul.mubr.f32.gmra.mrb[0].mxu0 %v1602
    %v1723 = vpop.f32.mrb[0].mxu0
    %v1724 = vadd.f32 0.0, %v1723
    %v1725 = vpop.f32.mrb[0].mxu0
    %1726 = vmatprep.mubr.f32.mxu0 0.0
    %1727 = vmatmul.mubr.f32.gmra.mrb[0].mxu0 %v1605
    %v1728 = vpop.f32.mrb[0].mxu0
    %v1729 = vadd.f32 0.0, %v1728
    %v1730 = vpop.f32.mrb[0].mxu0
    %1731 = vmatprep.mubr.f32.mxu0 0.0
    %1732 = vmatmul.mubr.f32.gmra.mrb[0].mxu0 %v1608
    %v1733 = vpop.f32.mrb[0].mxu0
    %v1734 = vadd.f32 0.0, %v1733
    %v1735 = vpop.f32.mrb[0].mxu0
    %1736 = vmatprep.mubr.f32.mxu0 0.0
    %1737 = vmatmul.mubr.f32.gmra.mrb[0].mxu0 %v1611
    %v1738 = vpop.f32.mrb[0].mxu0
    %v1739 = vadd.f32 0.0, %v1738
    %v1740 = vpop.f32.mrb[0].mxu0
    %1741 = vmatprep.mubr.f32.mxu0 0.0
    %1742 = vmatmul.mubr.f32.gmra.mrb[0].mxu0 %v1614
    %v1743 = vpop.f32.mrb[0].mxu0
    %v1744 = vadd.f32 0.0, %v1743
    %v1745 = vpop.f32.mrb[0].mxu0
    %1746 = vmatprep.mubr.f32.mxu0 0.0
    %1747 = vmatmul.mubr.f32.gmra.mrb[0].mxu0 %v1617
    %v1748 = vpop.f32.mrb[0].mxu0
    %v1749 = vadd.f32 0.0, %v1748
    %v1750 = vpop.f32.mrb[0].mxu0
    %1751 = vmatprep.mubr.f32.mxu0 0.0
    %1752 = vmatmul.mubr.f32.gmra.mrb[0].mxu0 %v1620
    %v1753 = vpop.f32.mrb[0].mxu0
    %v1754 = vadd.f32 0.0, %v1753
    %v1755 = vpop.f32.mrb[0].mxu0
    %1756 = vdwg.mxu0
    %v1757 = vld [vmem:[%s13] sm:$0xff]
    %v1758 = vld [vmem:[%s13 + $0x8] sm:$0xff]
    %v1759 = vld [vmem:[%s13 + $0x10] sm:$0x1f]
    %v1761 = vsel %vm687, %v1689, 0
    %v1764 = vsel %vm687, %v1694, 0
    %v1767 = vsel %vm687, %v1699, 0
    %v1770 = vsel %vm687, %v1704, 0
    %v1773 = vsel %vm687, %v1709, 0
    %v1776 = vsel %vm687, %v1714, 0
    %v1779 = vsel %vm687, %v1719, 0
    %v1782 = vsel %vm687, %v1724, 0
    %v1785 = vsel %vm687, %v1729, 0
    %v1788 = vsel %vm687, %v1734, 0
    %v1791 = vsel %vm687, %v1739, 0
    %v1794 = vsel %vm687, %v1744, 0
    %v1797 = vsel %vm687, %v1749, 0
    %v1800 = vsel %vm687, %v1754, 0
    %v1803 = vsel %vm131, %v1759, 0
    %1805 = vmatprep.subr.mxu0 0.0
    %1806 = vmatpush1.msra.mxu0 %v1757
    %1807 = vmatprep.subr.mxu0 0.0
    %1808 = vmatpush1.msra.mxu0 %v1758
    %1809 = vmatprep.subr.mxu0 0.0
    %1810 = vmatpush1.msra.mxu0 %v1803
    %1811 = vmatprep.subr.mxu0 0.0
    %1812 = vmatpush1.msra.mxu0 0.0
    %1813 = vmatprep.subr.mxu0 0.0
    %1814 = vmatpush1.msra.mxu0 0.0
    %1815 = vmatprep.subr.mxu0 0.0
    %1816 = vmatpush1.msra.mxu0 0.0
    %1817 = vmatprep.subr.mxu0 0.0
    %1818 = vmatpush1.msra.mxu0 0.0
    %1819 = vmatprep.subr.mxu0 0.0
    %1820 = vmatpush1.msra.mxu0 0.0
    %1821 = vmatprep.subr.mxu0 0.0
    %1822 = vmatpush1.msra.mxu0 0.0
    %1823 = vmatprep.subr.mxu0 0.0
    %1824 = vmatpush1.msra.mxu0 0.0
    %1825 = vmatprep.subr.mxu0 0.0
    %1826 = vmatpush1.msra.mxu0 0.0
    %1827 = vmatprep.subr.mxu0 0.0
    %1828 = vmatpush1.msra.mxu0 0.0
    %1829 = vmatprep.subr.mxu0 0.0
    %1830 = vmatpush1.msra.mxu0 0.0
    %1831 = vmatprep.subr.mxu0 0.0
    %1832 = vmatpush1.msra.mxu0 0.0
    %1833 = vmatprep.subr.mxu0 0.0
    %1834 = vmatpush1.msra.mxu0 0.0
    %1835 = vmatprep.subr.mxu0 0.0
    %1836 = vmatpush1.msra.mxu0 0.0
    %1837 = vmatprep.subr.mxu0 0.0
    %1838 = vmatpush1.msra.mxu0 0.0
    %1839 = vmatprep.subr.mxu0 0.0
    %1840 = vmatpush1.msra.mxu0 0.0
    %1841 = vmatprep.subr.mxu0 0.0
    %1842 = vmatpush1.msra.mxu0 0.0
    %1843 = vmatprep.subr.mxu0 0.0
    %1844 = vmatpush1.msra.mxu0 0.0
    %1845 = vmatprep.subr.mxu0 0.0
    %1846 = vmatpush1.msra.mxu0 0.0
    %1847 = vmatprep.subr.mxu0 0.0
    %1848 = vmatpush1.msra.mxu0 0.0
    %1849 = vmatprep.subr.mxu0 0.0
    %1850 = vmatpush1.msra.mxu0 0.0
    %1851 = vmatprep.subr.mxu0 0.0
    %1852 = vmatpush1.msra.mxu0 0.0
    %1853 = vmatprep.subr.mxu0 0.0
    %1854 = vmatpush1.msra.mxu0 0.0
    %1855 = vmatprep.subr.mxu0 0.0
    %1856 = vmatpush1.msra.mxu0 0.0
    %1857 = vmatprep.subr.mxu0 0.0
    %1858 = vmatpush1.msra.mxu0 0.0
    %1859 = vmatprep.subr.mxu0 0.0
    %1860 = vmatpush1.msra.mxu0 0.0
    %1861 = vmatprep.subr.mxu0 0.0
    %1862 = vmatpush1.msra.mxu0 0.0
    %1863 = vmatprep.subr.mxu0 0.0
    %1864 = vmatpush1.msra.mxu0 0.0
    %1865 = vmatprep.subr.mxu0 0.0
    %1866 = vmatpush1.msra.mxu0 0.0
    %1867 = vmatprep.subr.mxu0 0.0
    %1868 = vmatpush1.msra.mxu0 0.0
    %1869 = vmatprep.mubr.f32.mxu0 0.0
    %1870 = vmatmul.mubr.f32.gmra.mrb[0].mxu0 %v1761
    %v1871 = vpop.f32.mrb[0].mxu0
    %v1872 = vadd.f32 0.0, %v1871
    %v1873 = vpop.f32.mrb[0].mxu0
    %1874 = vmatprep.mubr.f32.mxu0 0.0
    %1875 = vmatmul.mubr.f32.gmra.mrb[0].mxu0 %v1764
    %v1876 = vpop.f32.mrb[0].mxu0
    %v1877 = vadd.f32 0.0, %v1876
    %v1878 = vpop.f32.mrb[0].mxu0
    %1879 = vmatprep.mubr.f32.mxu0 0.0
    %1880 = vmatmul.mubr.f32.gmra.mrb[0].mxu0 %v1767
    %v1881 = vpop.f32.mrb[0].mxu0
    %v1882 = vadd.f32 0.0, %v1881
    %v1883 = vpop.f32.mrb[0].mxu0
    %1884 = vmatprep.mubr.f32.mxu0 0.0
    %1885 = vmatmul.mubr.f32.gmra.mrb[0].mxu0 %v1770
    %v1886 = vpop.f32.mrb[0].mxu0
    %v1887 = vadd.f32 0.0, %v1886
    %v1888 = vpop.f32.mrb[0].mxu0
    %1889 = vmatprep.mubr.f32.mxu0 0.0
    %1890 = vmatmul.mubr.f32.gmra.mrb[0].mxu0 %v1773
    %v1891 = vpop.f32.mrb[0].mxu0
    %v1892 = vadd.f32 0.0, %v1891
    %v1893 = vpop.f32.mrb[0].mxu0
    %1894 = vmatprep.mubr.f32.mxu0 0.0
    %1895 = vmatmul.mubr.f32.gmra.mrb[0].mxu0 %v1776
    %v1896 = vpop.f32.mrb[0].mxu0
    %v1897 = vadd.f32 0.0, %v1896
    %v1898 = vpop.f32.mrb[0].mxu0
    %1899 = vmatprep.mubr.f32.mxu0 0.0
    %1900 = vmatmul.mubr.f32.gmra.mrb[0].mxu0 %v1779
    %v1901 = vpop.f32.mrb[0].mxu0
    %v1902 = vadd.f32 0.0, %v1901
    %v1903 = vpop.f32.mrb[0].mxu0
    %1904 = vmatprep.mubr.f32.mxu0 0.0
    %1905 = vmatmul.mubr.f32.gmra.mrb[0].mxu0 %v1782
    %v1906 = vpop.f32.mrb[0].mxu0
    %v1907 = vadd.f32 0.0, %v1906
    %v1908 = vpop.f32.mrb[0].mxu0
    %1909 = vmatprep.mubr.f32.mxu0 0.0
    %1910 = vmatmul.mubr.f32.gmra.mrb[0].mxu0 %v1785
    %v1911 = vpop.f32.mrb[0].mxu0
    %v1912 = vadd.f32 0.0, %v1911
    %v1913 = vpop.f32.mrb[0].mxu0
    %1914 = vmatprep.mubr.f32.mxu0 0.0
    %1915 = vmatmul.mubr.f32.gmra.mrb[0].mxu0 %v1788
    %v1916 = vpop.f32.mrb[0].mxu0
    %v1917 = vadd.f32 0.0, %v1916
    %v1918 = vpop.f32.mrb[0].mxu0
    %1919 = vmatprep.mubr.f32.mxu0 0.0
    %1920 = vmatmul.mubr.f32.gmra.mrb[0].mxu0 %v1791
    %v1921 = vpop.f32.mrb[0].mxu0
    %v1922 = vadd.f32 0.0, %v1921
    %v1923 = vpop.f32.mrb[0].mxu0
    %1924 = vmatprep.mubr.f32.mxu0 0.0
    %1925 = vmatmul.mubr.f32.gmra.mrb[0].mxu0 %v1794
    %v1926 = vpop.f32.mrb[0].mxu0
    %v1927 = vadd.f32 0.0, %v1926
    %v1928 = vpop.f32.mrb[0].mxu0
    %1929 = vmatprep.mubr.f32.mxu0 0.0
    %1930 = vmatmul.mubr.f32.gmra.mrb[0].mxu0 %v1797
    %v1931 = vpop.f32.mrb[0].mxu0
    %v1932 = vadd.f32 0.0, %v1931
    %v1933 = vpop.f32.mrb[0].mxu0
    %1934 = vmatprep.mubr.f32.mxu0 0.0
    %1935 = vmatmul.mubr.f32.gmra.mrb[0].mxu0 %v1800
    %v1936 = vpop.f32.mrb[0].mxu0
    %v1937 = vadd.f32 0.0, %v1936
    %v1938 = vpop.f32.mrb[0].mxu0
    %1939 = vdwg.mxu0
    %v1940 = vsel %vm702, %v1872, 0.0
    %v1941 = vsel %vm702, %v1877, 0.0
    %1944 = vrot.lane.b32.xlu0 %v1882, 1
    %v1945 = vpop.permute.xlu0 %1944
    %1946 = vrot.lane.b32.xlu0 %v1887, 1
    %v1947 = vpop.permute.xlu0 %1946
    %vm1950 = vcmask 7168
    %v1951 = vsel %vm1950, 0.0, %v1945
    %v1952 = vsel %vm1950, 0.0, %v1947
    %vm1953 = vcmask 506880
    %v1954 = vsel %vm1953, %v1951, 0.0
    %v1955 = vsel %vm1953, %v1952, 0.0
    %v1956 = vadd.f32 %v1940, %v1954
    %v1957 = vadd.f32 %v1941, %v1955
    %1960 = vrot.lane.b32.xlu0 %v1892, 2
    %v1961 = vpop.permute.xlu0 %1960
    %1962 = vrot.lane.b32.xlu0 %v1897, 2
    %v1963 = vpop.permute.xlu0 %1962
    %v1966 = vsel %vm491, 0.0, %v1961
    %v1967 = vsel %vm491, 0.0, %v1963
    %v1968 = vsel %vm691, %v1966, 0.0
    %v1969 = vsel %vm691, %v1967, 0.0
    %v1970 = vadd.f32 %v1956, %v1968
    %v1971 = vadd.f32 %v1957, %v1969
    %1974 = vrot.lane.b32.xlu0 %v1902, 3
    %v1975 = vpop.permute.xlu0 %1974
    %1976 = vrot.lane.b32.xlu0 %v1907, 3
    %v1977 = vpop.permute.xlu0 %1976
    %vm1980 = vcmask 23552
    %v1981 = vsel %vm1980, 0.0, %v1975
    %v1982 = vsel %vm1980, 0.0, %v1977
    %vm1983 = vcmask 523264
    %v1984 = vsel %vm1983, %v1981, 0.0
    %v1985 = vsel %vm1983, %v1982, 0.0
    %v1986 = vadd.f32 %v1970, %v1984
    %v1987 = vadd.f32 %v1971, %v1985
    %1990 = vrot.lane.b32.xlu0 %v1912, 4
    %v1991 = vpop.permute.xlu0 %1990
    %1992 = vrot.lane.b32.xlu0 %v1917, 4
    %v1993 = vpop.permute.xlu0 %1992
    %v1996 = vsel %vm1439, 0.0, %v1991
    %v1997 = vsel %vm1439, 0.0, %v1993
    %vm1998 = vcmask 531456
    %v1999 = vsel %vm1998, %v1996, 0.0
    %v2000 = vsel %vm1998, %v1997, 0.0
    %v2001 = vadd.f32 %v1986, %v1999
    %v2002 = vadd.f32 %v1987, %v2000
    %2005 = vrot.lane.b32.xlu0 %v1922, 5
    %v2006 = vpop.permute.xlu0 %2005
    %2007 = vrot.lane.b32.xlu0 %v1927, 5
    %v2008 = vpop.permute.xlu0 %2007
    %vm2011 = vcmask 39936
    %v2012 = vsel %vm2011, 0.0, %v2006
    %v2013 = vsel %vm2011, 0.0, %v2008
    %vm2014 = vcmask 539648
    %v2015 = vsel %vm2014, %v2012, 0.0
    %v2016 = vsel %vm2014, %v2013, 0.0
    %v2017 = vadd.f32 %v2001, %v2015
    %v2018 = vadd.f32 %v2002, %v2016
    %2021 = vrot.lane.b32.xlu0 %v1932, 6
    %v2022 = vpop.permute.xlu0 %2021
    %2023 = vrot.lane.b32.xlu0 %v1937, 6
    %v2024 = vpop.permute.xlu0 %2023
    %vm2027 = vcmask 48128
    %v2028 = vsel %vm2027, 0.0, %v2022
    %v2029 = vsel %vm2027, 0.0, %v2024
    %v2030 = vadd.f32 %v2017, %v2028
    %v2031 = vadd.f32 %v2018, %v2029
    %v2032 = vld [vmem:[%s12] sm:$0xff]
    %v2033 = vld [vmem:[%s12 + $0x8] sm:$0xff]
    %2035 = vset.pattern.permute.xlu0 0
    %2036 = vperm.xlu0 %2035, %v2032
    %v2037 = vpop.permute.xlu0 %2036
    %2040 = vset.pattern.permute.xlu0 0
    %2041 = vperm.xlu0 %2040, %v2033
    %v2042 = vpop.permute.xlu0 %2041
    %v2044 = vadd.f32 %v2030, %v2037
    %v2045 = vadd.f32 %v2031, %v2042
    %v2046 = vmax.f32 %v2044, 0.0
    %v2047 = vmax.f32 %v2045, 0.0
    %v2048 = vld [vmem:[%s14] sm:$0x7f]
    %vm2049 = vcmask 130048
    %v2051 = vsel %vm2049, %v2048, 0
    %2053 = vmatprep.subr.mxu0 0.0
    %2054 = vmatpush1.msra.mxu0 %v2046
    %2055 = vmatprep.subr.mxu0 0.0
    %2056 = vmatpush1.msra.mxu0 %v2047
    %2057 = vmatprep.subr.mxu0 0.0
    %2058 = vmatpush1.msra.mxu0 0.0
    %2059 = vmatprep.subr.mxu0 0.0
    %2060 = vmatpush1.msra.mxu0 0.0
    %2061 = vmatprep.subr.mxu0 0.0
    %2062 = vmatpush1.msra.mxu0 0.0
    %2063 = vmatprep.subr.mxu0 0.0
    %2064 = vmatpush1.msra.mxu0 0.0
    %2065 = vmatprep.subr.mxu0 0.0
    %2066 = vmatpush1.msra.mxu0 0.0
    %2067 = vmatprep.subr.mxu0 0.0
    %2068 = vmatpush1.msra.mxu0 0.0
    %2069 = vmatprep.subr.mxu0 0.0
    %2070 = vmatpush1.msra.mxu0 0.0
    %2071 = vmatprep.subr.mxu0 0.0
    %2072 = vmatpush1.msra.mxu0 0.0
    %2073 = vmatprep.subr.mxu0 0.0
    %2074 = vmatpush1.msra.mxu0 0.0
    %2075 = vmatprep.subr.mxu0 0.0
    %2076 = vmatpush1.msra.mxu0 0.0
    %2077 = vmatprep.subr.mxu0 0.0
    %2078 = vmatpush1.msra.mxu0 0.0
    %2079 = vmatprep.subr.mxu0 0.0
    %2080 = vmatpush1.msra.mxu0 0.0
    %2081 = vmatprep.subr.mxu0 0.0
    %2082 = vmatpush1.msra.mxu0 0.0
    %2083 = vmatprep.subr.mxu0 0.0
    %2084 = vmatpush1.msra.mxu0 0.0
    %2085 = vmatprep.subr.mxu0 0.0
    %2086 = vmatpush1.msra.mxu0 0.0
    %2087 = vmatprep.subr.mxu0 0.0
    %2088 = vmatpush1.msra.mxu0 0.0
    %2089 = vmatprep.subr.mxu0 0.0
    %2090 = vmatpush1.msra.mxu0 0.0
    %2091 = vmatprep.subr.mxu0 0.0
    %2092 = vmatpush1.msra.mxu0 0.0
    %2093 = vmatprep.subr.mxu0 0.0
    %2094 = vmatpush1.msra.mxu0 0.0
    %2095 = vmatprep.subr.mxu0 0.0
    %2096 = vmatpush1.msra.mxu0 0.0
    %2097 = vmatprep.subr.mxu0 0.0
    %2098 = vmatpush1.msra.mxu0 0.0
    %2099 = vmatprep.subr.mxu0 0.0
    %2100 = vmatpush1.msra.mxu0 0.0
    %2101 = vmatprep.subr.mxu0 0.0
    %2102 = vmatpush1.msra.mxu0 0.0
    %2103 = vmatprep.subr.mxu0 0.0
    %2104 = vmatpush1.msra.mxu0 0.0
    %2105 = vmatprep.subr.mxu0 0.0
    %2106 = vmatpush1.msra.mxu0 0.0
    %2107 = vmatprep.subr.mxu0 0.0
    %2108 = vmatpush1.msra.mxu0 0.0
    %2109 = vmatprep.subr.mxu0 0.0
    %2110 = vmatpush1.msra.mxu0 0.0
    %2111 = vmatprep.subr.mxu0 0.0
    %2112 = vmatpush1.msra.mxu0 0.0
    %2113 = vmatprep.subr.mxu0 0.0
    %2114 = vmatpush1.msra.mxu0 0.0
    %2115 = vmatprep.subr.mxu0 0.0
    %2116 = vmatpush1.msra.mxu0 0.0
    %2117 = vmatprep.mubr.f32.mxu0 0.0
    %2118 = vmatmul.mubr.f32.gmra.mrb[0].mxu0 %v2051
    %v2119 = vpop.f32.mrb[0].mxu0
    %v2120 = vadd.f32 0.0, %v2119
    %v2121 = vpop.f32.mrb[0].mxu0
    %2122 = vdwg.mxu0
    %v2123 = vld [vmem:[%s16] sm:$0xff]
    %v2124 = vld [vmem:[%s16 + $0x8] sm:$0xff]
    %v2125 = vld [vmem:[%s16 + $0x10] sm:$0xff]
    %v2126 = vld [vmem:[%s16 + $0x18] sm:$0xff]
    %v2127 = vld [vmem:[%s16 + $0x20] sm:$0xff]
    %v2128 = vld [vmem:[%s16 + $0x28] sm:$0xff]
    %v2129 = vld [vmem:[%s16 + $0x30] sm:$0xff]
    %v2130 = vld [vmem:[%s16 + $0x38] sm:$0xff]
    %v2131 = vld [vmem:[%s16 + $0x40] sm:$0xff]
    %v2132 = vld [vmem:[%s16 + $0x48] sm:$0xff]
    %v2133 = vld [vmem:[%s16 + $0x50] sm:$0xff]
    %v2134 = vld [vmem:[%s16 + $0x58] sm:$0xff]
    %v2135 = vld [vmem:[%s16 + $0x60] sm:$0xff]
    %v2136 = vld [vmem:[%s16 + $0x68] sm:$0xff]
    %v2137 = vld [vmem:[%s16 + $0x70] sm:$0xff]
    %v2138 = vld [vmem:[%s16 + $0x78] sm:$0xff]
    %v2139 = vld [vmem:[%s16 + $0x80] sm:$0x7]
    %v2140 = vld [vmem:[%s16 + $0x88] sm:$0x7]
    %v2142 = vsel %vm359, %v2120, 0
    %v2145 = vsel %vm125, %v2139, 0
    %v2148 = vsel %vm125, %v2140, 0
    %2150 = vmatprep.subr.mxu0 %v2124
    %2151 = vmatpush1.msra.mxu0 %v2123
    %2152 = vmatprep.subr.mxu0 %v2126
    %2153 = vmatpush1.msra.mxu0 %v2125
    %2154 = vmatprep.subr.mxu0 %v2128
    %2155 = vmatpush1.msra.mxu0 %v2127
    %2156 = vmatprep.subr.mxu0 %v2130
    %2157 = vmatpush1.msra.mxu0 %v2129
    %2158 = vmatprep.subr.mxu0 %v2132
    %2159 = vmatpush1.msra.mxu0 %v2131
    %2160 = vmatprep.subr.mxu0 %v2134
    %2161 = vmatpush1.msra.mxu0 %v2133
    %2162 = vmatprep.subr.mxu0 %v2136
    %2163 = vmatpush1.msra.mxu0 %v2135
    %2164 = vmatprep.subr.mxu0 %v2138
    %2165 = vmatpush1.msra.mxu0 %v2137
    %2166 = vmatprep.subr.mxu0 %v2148
    %2167 = vmatpush1.msra.mxu0 %v2145
    %2168 = vmatprep.subr.mxu0 0.0
    %2169 = vmatpush1.msra.mxu0 0.0
    %2170 = vmatprep.subr.mxu0 0.0
    %2171 = vmatpush1.msra.mxu0 0.0
    %2172 = vmatprep.subr.mxu0 0.0
    %2173 = vmatpush1.msra.mxu0 0.0
    %2174 = vmatprep.subr.mxu0 0.0
    %2175 = vmatpush1.msra.mxu0 0.0
    %2176 = vmatprep.subr.mxu0 0.0
    %2177 = vmatpush1.msra.mxu0 0.0
    %2178 = vmatprep.subr.mxu0 0.0
    %2179 = vmatpush1.msra.mxu0 0.0
    %2180 = vmatprep.subr.mxu0 0.0
    %2181 = vmatpush1.msra.mxu0 0.0
    %2182 = vmatprep.subr.mxu0 0.0
    %2183 = vmatpush1.msra.mxu0 0.0
    %2184 = vmatprep.subr.mxu0 0.0
    %2185 = vmatpush1.msra.mxu0 0.0
    %2186 = vmatprep.subr.mxu0 0.0
    %2187 = vmatpush1.msra.mxu0 0.0
    %2188 = vmatprep.subr.mxu0 0.0
    %2189 = vmatpush1.msra.mxu0 0.0
    %2190 = vmatprep.subr.mxu0 0.0
    %2191 = vmatpush1.msra.mxu0 0.0
    %2192 = vmatprep.subr.mxu0 0.0
    %2193 = vmatpush1.msra.mxu0 0.0
    %2194 = vmatprep.subr.mxu0 0.0
    %2195 = vmatpush1.msra.mxu0 0.0
    %2196 = vmatprep.subr.mxu0 0.0
    %2197 = vmatpush1.msra.mxu0 0.0
    %2198 = vmatprep.subr.mxu0 0.0
    %2199 = vmatpush1.msra.mxu0 0.0
    %2200 = vmatprep.subr.mxu0 0.0
    %2201 = vmatpush1.msra.mxu0 0.0
    %2202 = vmatprep.subr.mxu0 0.0
    %2203 = vmatpush1.msra.mxu0 0.0
    %2204 = vmatprep.subr.mxu0 0.0
    %2205 = vmatpush1.msra.mxu0 0.0
    %2206 = vmatprep.subr.mxu0 0.0
    %2207 = vmatpush1.msra.mxu0 0.0
    %2208 = vmatprep.subr.mxu0 0.0
    %2209 = vmatpush1.msra.mxu0 0.0
    %2210 = vmatprep.subr.mxu0 0.0
    %2211 = vmatpush1.msra.mxu0 0.0
    %2212 = vmatprep.subr.mxu0 0.0
    %2213 = vmatpush1.msra.mxu0 0.0
    %2214 = vmatprep.mubr.f32.mxu0 0.0
    %2215 = vmatmul.mubr.f32.gmra.mrb[0].mxu0 %v2142
    %v2216 = vpop.f32.mrb[0].mxu0
    %v2217 = vadd.f32 0.0, %v2216
    %v2218 = vpop.f32.mrb[0].mxu0
    %v2219 = vadd.f32 0.0, %v2218
    %2220 = vdwg.mxu0
    %v2221 = vsel %vm162, %v2219, 0.0
    %v2224 = vrot.slane %v2217, 1
    %v2225 = vrot.slane %v2219, 1
    %2226 = vrot.lane.b32.xlu0 %v2224, 1
    %v2227 = vpop.permute.xlu0 %2226
    %2228 = vrot.lane.b32.xlu0 %v2225, 1
    %v2229 = vpop.permute.xlu0 %2228
    %v2230 = vsel %vm1950, %v2227, %v2229
    %v2233 = vsel %vm1950, 0.0, %v2227
    %vm2234 = vcmask 588800
    %v2235 = vsel %vm2234, %v2230, 0.0
    %v2236 = vadd.f32 %v2217, %v2233
    %v2237 = vadd.f32 %v2221, %v2235
    %v2238 = vrot.slane %v2217, 2
    %v2239 = vrot.slane %v2219, 2
    %2240 = vrot.lane.b32.xlu0 %v2238, 2
    %v2241 = vpop.permute.xlu0 %2240
    %2242 = vrot.lane.b32.xlu0 %v2239, 2
    %v2243 = vpop.permute.xlu0 %2242
    %v2244 = vsel %vm491, %v2241, %v2243
    %v2247 = vsel %vm491, 0.0, %v2241
    %vm2248 = vcmask 596992
    %v2249 = vsel %vm2248, %v2244, 0.0
    %v2250 = vadd.f32 %v2236, %v2247
    %v2251 = vadd.f32 %v2237, %v2249
    %v2252 = vrot.slane %v2217, 3
    %v2253 = vrot.slane %v2219, 3
    %2254 = vrot.lane.b32.xlu0 %v2252, 3
    %v2255 = vpop.permute.xlu0 %2254
    %2256 = vrot.lane.b32.xlu0 %v2253, 3
    %v2257 = vpop.permute.xlu0 %2256
    %v2258 = vsel %vm1980, %v2255, %v2257
    %v2261 = vsel %vm1980, 0.0, %v2255
    %vm2262 = vcmask 605184
    %v2263 = vsel %vm2262, %v2258, 0.0
    %v2264 = vadd.f32 %v2250, %v2261
    %v2265 = vadd.f32 %v2251, %v2263
    %v2266 = vrot.slane %v2217, 4
    %v2267 = vrot.slane %v2219, 4
    %2268 = vrot.lane.b32.xlu0 %v2266, 4
    %v2269 = vpop.permute.xlu0 %2268
    %2270 = vrot.lane.b32.xlu0 %v2267, 4
    %v2271 = vpop.permute.xlu0 %2270
    %v2272 = vsel %vm1439, %v2269, %v2271
    %v2275 = vsel %vm1439, 0.0, %v2269
    %vm2276 = vcmask 613376
    %v2277 = vsel %vm2276, %v2272, 0.0
    %v2278 = vadd.f32 %v2264, %v2275
    %v2279 = vadd.f32 %v2265, %v2277
    %v2280 = vrot.slane %v2217, 5
    %v2281 = vrot.slane %v2219, 5
    %2282 = vrot.lane.b32.xlu0 %v2280, 5
    %v2283 = vpop.permute.xlu0 %2282
    %2284 = vrot.lane.b32.xlu0 %v2281, 5
    %v2285 = vpop.permute.xlu0 %2284
    %v2286 = vsel %vm2011, %v2283, %v2285
    %v2289 = vsel %vm2011, 0.0, %v2283
    %vm2290 = vcmask 621568
    %v2291 = vsel %vm2290, %v2286, 0.0
    %v2292 = vadd.f32 %v2278, %v2289
    %v2293 = vadd.f32 %v2279, %v2291
    %v2294 = vrot.slane %v2217, 6
    %v2295 = vrot.slane %v2219, 6
    %2296 = vrot.lane.b32.xlu0 %v2294, 6
    %v2297 = vpop.permute.xlu0 %2296
    %2298 = vrot.lane.b32.xlu0 %v2295, 6
    %v2299 = vpop.permute.xlu0 %2298
    %v2300 = vsel %vm2027, %v2297, %v2299
    %v2303 = vsel %vm2027, 0.0, %v2297
    %v2304 = vadd.f32 %v2292, %v2303
    %v2305 = vadd.f32 %v2293, %v2300
    %v2306 = vld [vmem:[#allocation2] sm:$0x1]
    %2308 = vset.pattern.permute.xlu0 0
    %2309 = vperm.xlu0 %2308, %v2306
    %v2310 = vpop.permute.xlu0 %2309
    %v2312 = vlaneseq
    %v2313 = vshrl.u32 %v2312, 7
    %v2314 = vsub.s32 0, %v2313
    %v2315 = vrot.slane %v2310, %v2314
    %v2316 = vadd.f32 %v2304, %v2315
    %v2317 = vadd.f32 %v2305, %v2315
    %vm2318 = vcmask 629760
    %v2319 = vsel %vm2318, %v2317, 0.0
    %v2320 = vlaneseq
    %v2321 = vshrl.u32 %v2320, 7
    %v2322 = vsub.s32 0, %v2321
    %v2323 = vrot.slane %v2316, %v2322
    %v2324 = vlaneseq
    %v2325 = vshrl.u32 %v2324, 7
    %v2326 = vsub.s32 0, %v2325
    %v2327 = vrot.slane %v2319, %v2326
    %2328 = vst [vmem:[#allocation3] sm:$0xff] %v2323
    %2329 = vst [vmem:[#allocation3 + $0x8] sm:$0xff] %v2327
    // Predicated region
    $region70: #{tpu_custom_call.1} parent=1 // pred_check
      _
    $region71: #{tpu_custom_call.1} parent=1 // pred_check_branch
      %2331 = sbr.rel (0) target = $region73
    $region72: #{tpu_custom_call.1} parent=1 // pred_region
      %s2333 = ssub.s32 256, 256
      %2334 = vsyncadd [#allocation4], %s2333
      %s2336 = sshll.u32 [#allocation3], 4
      %s2337 = int_to_ptr.vmem [resolvable:$true] %s2336
      %2339 = dma.vmem_to_hbm [thread:$0]  %s2337, 256, %s17, [#allocation4]
    $region73: #{tpu_custom_call.1} parent=1 // pred_fallthru
      _
    // Predicated region
    $region74: #{tpu_custom_call.1} parent=1 // pred_check
      _
    $region75: #{tpu_custom_call.1} parent=1 // pred_check_branch
      %2341 = sbr.rel (0) target = $region77
    $region76: #{tpu_custom_call.1} parent=1 // pred_region
      %2342 = dma.done [#allocation4], 256
    $region77: #{tpu_custom_call.1} parent=1 // pred_fallthru
      _
    %2343 = vsyncpa [#allocation4], 1

</llo_original>
